<compile_context>
chip_gen: v7x
topology: tpu7x:2x2x1
jax: 0.10.0
libtpu: 0.0.40
codegen_flags: <defaults>
</compile_context>

<pallas_src>
import jax
import jax.numpy as jnp
from jax.experimental import pallas as pl
from jax.experimental.pallas import tpu as pltpu


def _bcast_add_kernel(x_ref, c_ref, o_ref):
    # x_ref: (TILE_ROWS, S), c_ref: (1, S) -> broadcast add over rows.
    o_ref[...] = x_ref[...] + c_ref[...]


def _pick_tile_rows(rows, cols, itemsize,
                    vmem_budget_bytes=12 * 1024 * 1024, min_grid=4):
    """Largest sublane-aligned divisor of `rows` that fits the VMEM budget.

    Budget model: 2x-buffered input + 2x-buffered (aliased) output blocks
    => ~4 * tile_rows * cols * itemsize bytes (the (1, cols) bias is
    negligible). Prefer tiles that leave >= min_grid grid steps so both
    v7x TensorCores stay busy with double-buffering.
    """
    def vmem_ok(t):
        return 4 * t * cols * itemsize <= vmem_budget_bytes

    candidates = [d for d in range(rows, 0, -1)
                  if rows % d == 0 and (d % 8 == 0 or d == rows)]
    for t in candidates:                       # best: fits VMEM, grid >= min_grid
        if vmem_ok(t) and rows // t >= min_grid:
            return t
    for t in candidates:                       # fallback: largest that fits VMEM
        if vmem_ok(t):
            return t
    return min(rows, 8)                        # last resort


def broadcast_add(x, const):
    """x: (B, H, S, S) f32, const: (1, 1, 1, S) f32 -> x + const (broadcast)."""
    B, H, S1, S2 = x.shape
    assert const.shape == (1, 1, 1, S2)

    rows = B * H * S1
    x2d = x.reshape(rows, S2)
    c2d = const.reshape(1, S2)

    tile_rows = _pick_tile_rows(rows, S2, x.dtype.itemsize)
    grid = (rows // tile_rows,)

    out2d = pl.pallas_call(
        _bcast_add_kernel,
        out_shape=jax.ShapeDtypeStruct((rows, S2), x.dtype),
        grid_spec=pl.GridSpec(
            grid=grid,
            in_specs=[
                pl.BlockSpec((tile_rows, S2), lambda i: (i, 0)),
                # Constant index_map: the tiny bias stays resident in VMEM.
                pl.BlockSpec((1, S2), lambda i: (0, 0)),
            ],
            out_specs=pl.BlockSpec((tile_rows, S2), lambda i: (i, 0)),
        ),
        # In-place add on x2d's buffer (input 0 -> output 0).
        input_output_aliases={0: 0},
        compiler_params=pltpu.CompilerParams(
            dimension_semantics=("parallel",),
        ),
    )(x2d, c2d)

    return out2d.reshape(B, H, S1, S2)


if __name__ == "__main__":
    key = jax.random.PRNGKey(0)
    k1, k2 = jax.random.split(key)

    # Shapes implied by the module's forward: x301 is (1, 12, 384, 384),
    # the constant is (1, 1, 1, 384).
    x = jax.random.normal(k1, (1, 12, 384, 384), dtype=jnp.float32)
    const = jax.random.uniform(k2, (1, 1, 1, 384), dtype=jnp.float32)

    # Reference computed first (the kernel aliases/donates its 2D input view).
    ref = x + const

    out = broadcast_add(x, const)
    out = jax.block_until_ready(out)

    assert out.shape == (1, 12, 384, 384)
    assert out.dtype == jnp.float32
    assert jnp.allclose(out, ref, atol=1e-6, rtol=1e-6)

    print("KERNEL_OK")
</pallas_src>

<mosaic_0001>
module attributes {stable_mosaic.version = 11 : i64} {
  func.func @_bcast_add_kernel(%arg0: i32, %arg1: memref<1152x384xf32, #tpu.memory_space<vmem>>, %arg2: memref<1x384xf32, #tpu.memory_space<vmem>>, %arg3: memref<1152x384xf32, #tpu.memory_space<vmem>>) attributes {dimension_semantics = [#tpu.dimension_semantics<parallel>], iteration_bounds = array<i64: 4>, scalar_prefetch = 0 : i64, scratch_operands = 0 : i64, tpu.core_type = #tpu.core_type<tc>, window_params = [{transform_indices = @transform_0, window_bounds = array<i64: 1152, 384>}, {pipeline_mode = #tpu.pipeline_mode<synchronous>, transform_indices = @transform_1, window_bounds = array<i64: 1, 384>}, {transform_indices = @transform_2, window_bounds = array<i64: 1152, 384>}]} {
    %c0 = arith.constant 0 : index
    %c0_0 = arith.constant 0 : index
    %0 = vector.load %arg1[%c0, %c0_0] : memref<1152x384xf32, #tpu.memory_space<vmem>>, vector<1152x384xf32>
    %c0_1 = arith.constant 0 : index
    %c0_2 = arith.constant 0 : index
    %1 = vector.load %arg2[%c0_1, %c0_2] : memref<1x384xf32, #tpu.memory_space<vmem>>, vector<1x384xf32>
    %2 = vector.broadcast %1 : vector<1x384xf32> to vector<1152x384xf32>
    %3 = arith.addf %0, %2 : vector<1152x384xf32>
    %c0_3 = arith.constant 0 : index
    %c0_4 = arith.constant 0 : index
    %4 = vector.load %arg3[%c0_3, %c0_4] : memref<1152x384xf32, #tpu.memory_space<vmem>>, vector<1152x384xf32>
    tpu.vector_store %arg3[%c0_3, %c0_4], %3 {strides = array<i32>} : memref<1152x384xf32, #tpu.memory_space<vmem>>, vector<1152x384xf32>,
    return
  }
  func.func @transform_0(%arg0: i32) -> (i32, i32) {
    %c0_i32 = arith.constant 0 : i32
    %c0_i32_0 = arith.constant 0 : i32
    return %arg0, %c0_i32 : i32, i32
  }
  func.func @transform_1(%arg0: i32) -> (i32, i32) {
    %c0_i32 = arith.constant 0 : i32
    %c0_i32_0 = arith.constant 0 : i32
    %c0_i32_1 = arith.constant 0 : i32
    return %c0_i32, %c0_i32_0 : i32, i32
  }
  func.func @transform_2(%arg0: i32) -> (i32, i32) {
    %c0_i32 = arith.constant 0 : i32
    %c0_i32_0 = arith.constant 0 : i32
    return %arg0, %c0_i32 : i32, i32
  }
}

</mosaic_0001>

<llo_original>
// kernel: tpu_custom_call.1
$region0: #{tpu_custom_call.1}
  #allocation0 [shape = 'u32[]', space=smem, size = 0x4, offset = 0x4, fixed_abs, tag = 'smem constant byte address 0x4 - core index']
  #allocation1 [shape = 'u32[144,128]{1,0:T(1,128)}', space=vmem, size = 0x12000, scoped, tag = 'internal scratch']
  %s0 = inlined_call_operand.hbm [shape: f32[4608,384], index: 0, kind: input, shape index: {}, may-alias: {0,2}]
  %s1 = inlined_call_operand.vmem [shape: f32[1,384], index: 1, kind: input, shape index: {}]
  %s2 = inlined_call_operand.hbm [shape: f32[4608,384], index: 2, kind: output, shape index: {}, may-alias: {0,2}]
  %s3 = sld [smem:[#allocation0]]
  $region45: #{tpu_custom_call.1} parent=0
    _
  %s5 = ssub.s32 1, %s3
  %s6 = scalar_select 0, %s5, %s3
  $region1: #{tpu_custom_call.1} parent=0
    #allocation2 [shape = 'u8[3538944]{0}', space=vmem, size = 0x360000, scoped, tag = 'input window, operand 0']
    #allocation3 [shape = 's32[2]{0}', space=sflag, size = 0x8, scoped, tag = 'scoped memory for tpu_custom_call.1']
    #allocation4 [shape = 's32[2]{0}', space=sflag, size = 0x8, scoped, tag = 'scoped memory for tpu_custom_call.1']
    #allocation5 [shape = 'u8[3538944]{0}', space=vmem, size = 0x360000, scoped, tag = 'output window, operand 0']
    %7 = vsyncpa [#allocation3], 0
    %s8 = scalar_lea.sflag [#allocation3], 1
    %9 = vsyncpa %s8, 0
    %10 = vsyncpa [#allocation4], 0
    %s11 = scalar_lea.sflag [#allocation4], 1
    %12 = vsyncpa %s11, 0
    loop: start=0, step=1, limit=6
    $region2: #{tpu_custom_call.1} parent=1 // loop_pre_header
      _
    $region3: #{tpu_custom_call.1} parent=1 // loop_header
      %s14 = sphi 0, %s18
      %p15 = scmp.ge.s32.totalorder %s14, 6
      %s24 = sphi 0, %s26
      %s27 = sphi 0, %s24
      %s28 = sphi 0, %s27
      %s44 = sphi 0, %s28
      %s48 = sphi 0, %s48
      %s50 = sphi 0, %s48
      %s51 = sphi 0, %s50
      %s65 = sphi 0, %s51
      %s71 = sphi 0, %s73
      %s74 = sphi 0, %s71
      %s75 = sphi 0, %s74
      %s91 = sphi 0, %s75
    $region4: #{tpu_custom_call.1} parent=1 // loop_header_branch
      %17 = sbr.rel (%p15) target = $region8
    $region5: #{tpu_custom_call.1} parent=1 // loop_body
      %s19 = ssub.s32 %s14, 1
      %s20 = ssub.s32 %s14, 2
      %s21 = sadd.s32 %s14, 1
      %s22 = ssub.s32 %s14, %s21
      %p23 = scmp.eq.s32.totalorder %s22, 0
      %s25 = sadd.s32 %s24, 1
      %s26 = scalar_select %p23, %s24, %s25
      %p29 = pneg %p23
      %p30 = scmp.eq.s32.totalorder %s14, 3
      %p31 = por %p29, %p30
      %p32 = scmp.ne.s32.totalorder %s24, %s27
      %p33 = scmp.eq.s32.totalorder %s14, 0
      %p34 = por %p32, %p33
      %p35 = scmp.ne.s32.totalorder %s24, %s27
      %p36 = scmp.eq.s32.totalorder %s19, 3
      %p37 = por %p35, %p36
      %p38 = scmp.ne.s32.totalorder %s27, %s28
      %p39 = scmp.eq.s32.totalorder %s19, 0
      %p40 = por %p38, %p39
      %p41 = scmp.ne.s32.totalorder %s27, %s28
      %p42 = scmp.eq.s32.totalorder %s20, 3
      %p43 = por %p41, %p42
      %p45 = scmp.ne.s32.totalorder %s28, %s44
      %p46 = scmp.eq.s32.totalorder %s20, 0
      %p47 = por %p45, %p46
      %s49 = sadd.s32 %s48, 1
      %p52 = scmp.eq.s32.totalorder %s14, 3
      %p53 = scmp.ne.s32.totalorder %s48, %s50
      %p54 = scmp.eq.s32.totalorder %s14, 0
      %p55 = por %p53, %p54
      %p56 = scmp.ne.s32.totalorder %s48, %s50
      %p57 = scmp.eq.s32.totalorder %s19, 3
      %p58 = por %p56, %p57
      %p59 = scmp.ne.s32.totalorder %s50, %s51
      %p60 = scmp.eq.s32.totalorder %s19, 0
      %p61 = por %p59, %p60
      %p62 = scmp.ne.s32.totalorder %s50, %s51
      %p63 = scmp.eq.s32.totalorder %s20, 3
      %p64 = por %p62, %p63
      %p66 = scmp.ne.s32.totalorder %s51, %s65
      %p67 = scmp.eq.s32.totalorder %s20, 0
      %p68 = por %p66, %p67
      %s69 = ssub.s32 %s14, %s21
      %p70 = scmp.eq.s32.totalorder %s69, 0
      %s72 = sadd.s32 %s71, 1
      %s73 = scalar_select %p70, %s71, %s72
      %p76 = pneg %p70
      %p77 = scmp.eq.s32.totalorder %s14, 3
      %p78 = por %p76, %p77
      %p79 = scmp.ne.s32.totalorder %s71, %s74
      %p80 = scmp.eq.s32.totalorder %s14, 0
      %p81 = por %p79, %p80
      %p82 = scmp.ne.s32.totalorder %s71, %s74
      %p83 = scmp.eq.s32.totalorder %s19, 3
      %p84 = por %p82, %p83
      %p85 = scmp.ne.s32.totalorder %s74, %s75
      %p86 = scmp.eq.s32.totalorder %s19, 0
      %p87 = por %p85, %p86
      %p88 = scmp.ne.s32.totalorder %s74, %s75
      %p89 = scmp.eq.s32.totalorder %s20, 3
      %p90 = por %p88, %p89
      %p92 = scmp.ne.s32.totalorder %s75, %s91
      %p93 = scmp.eq.s32.totalorder %s20, 0
      %p94 = por %p92, %p93
      %p95 = scmp.le.s32.totalorder 1, %s14
      %p96 = scmp.lt.s32.totalorder %s14, 5
      %p97 = pnand %p95, %p96
      %p98 = pneg %p97
      // Predicated region
      $region9: #{tpu_custom_call.1} parent=5 // pred_check
        _
      $region10: #{tpu_custom_call.1} parent=5 // pred_check_branch
        %100 = sbr.rel (%p97) target = $region12
      $region11: #{tpu_custom_call.1} parent=5 // pred_region
        %s101 = ssub.s32 %s14, 1
        // Predicated region
        $region13: #{tpu_custom_call.1} parent=11 // pred_check
          %p102 = pneg %p61
        $region14: #{tpu_custom_call.1} parent=11 // pred_check_branch
          %104 = sbr.rel (%p102) target = $region16
        $region15: #{tpu_custom_call.1} parent=11 // pred_region
          _
        $region16: #{tpu_custom_call.1} parent=11 // pred_fallthru
          _
      $region12: #{tpu_custom_call.1} parent=5 // pred_fallthru
        _
      %p105 = scmp.lt.s32.totalorder %s14, 4
      // Predicated region
      $region17: #{tpu_custom_call.1} parent=5 // pred_check
        %p106 = pneg %p105
      $region18: #{tpu_custom_call.1} parent=5 // pred_check_branch
        %108 = sbr.rel (%p106) target = $region20
      $region19: #{tpu_custom_call.1} parent=5 // pred_region
        // Predicated region
        $region21: #{tpu_custom_call.1} parent=19 // pred_check
          %p109 = pneg %p34
        $region22: #{tpu_custom_call.1} parent=19 // pred_check_branch
          %111 = sbr.rel (%p109) target = $region24
        $region23: #{tpu_custom_call.1} parent=19 // pred_region
          %s112 = sand.u32 %s24, 1
          %s113 = scalar_lea.sflag [#allocation3], %s112
          %s114 = sand.u32 %s24, 1
          %s115 = smul.addr %s114, 3456
          %s116 = scalar_lea.vmem [#allocation2], %s115
          %s117 = smul.u32 144, %s14
          %s119 = ssub.s32 55296, 55296
          %120 = vsyncadd %s113, %s119
          %s121 = smul.addr %s117, 3
          %s122 = smul.addr %s121, 128
          %s123 = scalar_lea.hbm %s0, %s122
          %s124 = sshll.u32 %s116, 4
          %s125 = int_to_ptr.vmem [resolvable:$true] %s124
          %130 = dma.hbm_to_vmem [thread:$0]  %s123, 55296, %s125, %s113, 384, 384, 24
        $region24: #{tpu_custom_call.1} parent=19 // pred_fallthru
          _
      $region20: #{tpu_custom_call.1} parent=5 // pred_fallthru
        _
      %p131 = scmp.le.s32.totalorder 1, %s14
      %p132 = scmp.lt.s32.totalorder %s14, 5
      %p133 = pnand %p131, %p132
      %p134 = pneg %p133
      // Predicated region
      $region25: #{tpu_custom_call.1} parent=5 // pred_check
        _
      $region26: #{tpu_custom_call.1} parent=5 // pred_check_branch
        %136 = sbr.rel (%p133) target = $region28
      $region27: #{tpu_custom_call.1} parent=5 // pred_region
        %s137 = ssub.s32 %s14, 1
        %s138 = sand.u32 %s27, 1
        %s139 = scalar_lea.sflag [#allocation3], %s138
        %s140 = sand.u32 %s27, 1
        %s141 = smul.addr %s140, 3456
        %s142 = scalar_lea.vmem [#allocation2], %s141
        // Predicated region
        $region29: #{tpu_custom_call.1} parent=27 // pred_check
          %p143 = pneg %p40
        $region30: #{tpu_custom_call.1} parent=27 // pred_check_branch
          %145 = sbr.rel (%p143) target = $region32
        $region31: #{tpu_custom_call.1} parent=27 // pred_region
          %146 = dma.done %s139, 55296
        $region32: #{tpu_custom_call.1} parent=27 // pred_fallthru
          _
        %s147 = sand.u32 %s27, 1
        %s148 = scalar_lea.sflag [#allocation3], %s147
        %s149 = sand.u32 %s27, 1
        %s150 = smul.addr %s149, 3456
        %s151 = scalar_lea.vmem [#allocation2], %s150
        %p152 = pneg %p40
        %p153 = pneg %p37
        %p154 = pneg %p61
        %p155 = pneg %p58
        %p156 = pneg %p87
        %p157 = pneg %p84
        %s158 = sand.u32 %s74, 1
        %s159 = scalar_lea.sflag [#allocation4], %s158
        %s160 = sand.u32 %s74, 1
        %s161 = smul.addr %s160, 3456
        %s162 = scalar_lea.vmem [#allocation5], %s161
        %s163 = smul.u32 144, %s19
        %s164 = smul.u32 144, %s19
        %v165 = vld [vmem:[%s142] sm:$0xff]
        %v166 = vld [vmem:[%s142 + $0x8] sm:$0xff]
        %v167 = vld [vmem:[%s142 + $0x10] sm:$0xff]
        %v168 = vld [vmem:[%s142 + $0x18] sm:$0xff]
        %v169 = vld [vmem:[%s142 + $0x20] sm:$0xff]
        %v170 = vld [vmem:[%s142 + $0x28] sm:$0xff]
        %v171 = vld [vmem:[%s142 + $0x30] sm:$0xff]
        %v172 = vld [vmem:[%s142 + $0x38] sm:$0xff]
        %v173 = vld [vmem:[%s142 + $0x40] sm:$0xff]
        %v174 = vld [vmem:[%s142 + $0x48] sm:$0xff]
        %v175 = vld [vmem:[%s142 + $0x50] sm:$0xff]
        %v176 = vld [vmem:[%s142 + $0x58] sm:$0xff]
        %v177 = vld [vmem:[%s142 + $0x60] sm:$0xff]
        %v178 = vld [vmem:[%s142 + $0x68] sm:$0xff]
        %v179 = vld [vmem:[%s142 + $0x70] sm:$0xff]
        %v180 = vld [vmem:[%s142 + $0x78] sm:$0xff]
        %v181 = vld [vmem:[%s142 + $0x80] sm:$0xff]
        %v182 = vld [vmem:[%s142 + $0x88] sm:$0xff]
        %v183 = vld [vmem:[%s142 + $0x90] sm:$0xff]
        %v184 = vld [vmem:[%s142 + $0x98] sm:$0xff]
        %v185 = vld [vmem:[%s142 + $0xa0] sm:$0xff]
        %v186 = vld [vmem:[%s142 + $0xa8] sm:$0xff]
        %v187 = vld [vmem:[%s142 + $0xb0] sm:$0xff]
        %v188 = vld [vmem:[%s142 + $0xb8] sm:$0xff]
        %v189 = vld [vmem:[%s142 + $0xc0] sm:$0xff]
        %v190 = vld [vmem:[%s142 + $0xc8] sm:$0xff]
        %v191 = vld [vmem:[%s142 + $0xd0] sm:$0xff]
        %v192 = vld [vmem:[%s142 + $0xd8] sm:$0xff]
        %v193 = vld [vmem:[%s142 + $0xe0] sm:$0xff]
        %v194 = vld [vmem:[%s142 + $0xe8] sm:$0xff]
        %v195 = vld [vmem:[%s142 + $0xf0] sm:$0xff]
        %v196 = vld [vmem:[%s142 + $0xf8] sm:$0xff]
        %v197 = vld [vmem:[%s142 + $0x100] sm:$0xff]
        %v198 = vld [vmem:[%s142 + $0x108] sm:$0xff]
        %v199 = vld [vmem:[%s142 + $0x110] sm:$0xff]
        %v200 = vld [vmem:[%s142 + $0x118] sm:$0xff]
        %v201 = vld [vmem:[%s142 + $0x120] sm:$0xff]
        %v202 = vld [vmem:[%s142 + $0x128] sm:$0xff]
        %v203 = vld [vmem:[%s142 + $0x130] sm:$0xff]
        %v204 = vld [vmem:[%s142 + $0x138] sm:$0xff]
        %v205 = vld [vmem:[%s142 + $0x140] sm:$0xff]
        %v206 = vld [vmem:[%s142 + $0x148] sm:$0xff]
        %v207 = vld [vmem:[%s142 + $0x150] sm:$0xff]
        %v208 = vld [vmem:[%s142 + $0x158] sm:$0xff]
        %v209 = vld [vmem:[%s142 + $0x160] sm:$0xff]
        %v210 = vld [vmem:[%s142 + $0x168] sm:$0xff]
        %v211 = vld [vmem:[%s142 + $0x170] sm:$0xff]
        %v212 = vld [vmem:[%s142 + $0x178] sm:$0xff]
        %v213 = vld [vmem:[%s142 + $0x180] sm:$0xff]
        %v214 = vld [vmem:[%s142 + $0x188] sm:$0xff]
        %v215 = vld [vmem:[%s142 + $0x190] sm:$0xff]
        %v216 = vld [vmem:[%s142 + $0x198] sm:$0xff]
        %v217 = vld [vmem:[%s142 + $0x1a0] sm:$0xff]
        %v218 = vld [vmem:[%s142 + $0x1a8] sm:$0xff]
        %v219 = vld [vmem:[%s142 + $0x1b0] sm:$0xff]
        %v220 = vld [vmem:[%s142 + $0x1b8] sm:$0xff]
        %v221 = vld [vmem:[%s142 + $0x1c0] sm:$0xff]
        %v222 = vld [vmem:[%s142 + $0x1c8] sm:$0xff]
        %v223 = vld [vmem:[%s142 + $0x1d0] sm:$0xff]
        %v224 = vld [vmem:[%s142 + $0x1d8] sm:$0xff]
        %v225 = vld [vmem:[%s142 + $0x1e0] sm:$0xff]
        %v226 = vld [vmem:[%s142 + $0x1e8] sm:$0xff]
        %v227 = vld [vmem:[%s142 + $0x1f0] sm:$0xff]
        %v228 = vld [vmem:[%s142 + $0x1f8] sm:$0xff]
        %v229 = vld [vmem:[%s142 + $0x200] sm:$0xff]
        %v230 = vld [vmem:[%s142 + $0x208] sm:$0xff]
        %v231 = vld [vmem:[%s142 + $0x210] sm:$0xff]
        %v232 = vld [vmem:[%s142 + $0x218] sm:$0xff]
        %v233 = vld [vmem:[%s142 + $0x220] sm:$0xff]
        %v234 = vld [vmem:[%s142 + $0x228] sm:$0xff]
        %v235 = vld [vmem:[%s142 + $0x230] sm:$0xff]
        %v236 = vld [vmem:[%s142 + $0x238] sm:$0xff]
        %v237 = vld [vmem:[%s142 + $0x240] sm:$0xff]
        %v238 = vld [vmem:[%s142 + $0x248] sm:$0xff]
        %v239 = vld [vmem:[%s142 + $0x250] sm:$0xff]
        %v240 = vld [vmem:[%s142 + $0x258] sm:$0xff]
        %v241 = vld [vmem:[%s142 + $0x260] sm:$0xff]
        %v242 = vld [vmem:[%s142 + $0x268] sm:$0xff]
        %v243 = vld [vmem:[%s142 + $0x270] sm:$0xff]
        %v244 = vld [vmem:[%s142 + $0x278] sm:$0xff]
        %v245 = vld [vmem:[%s142 + $0x280] sm:$0xff]
        %v246 = vld [vmem:[%s142 + $0x288] sm:$0xff]
        %v247 = vld [vmem:[%s142 + $0x290] sm:$0xff]
        %v248 = vld [vmem:[%s142 + $0x298] sm:$0xff]
        %v249 = vld [vmem:[%s142 + $0x2a0] sm:$0xff]
        %v250 = vld [vmem:[%s142 + $0x2a8] sm:$0xff]
        %v251 = vld [vmem:[%s142 + $0x2b0] sm:$0xff]
        %v252 = vld [vmem:[%s142 + $0x2b8] sm:$0xff]
        %v253 = vld [vmem:[%s142 + $0x2c0] sm:$0xff]
        %v254 = vld [vmem:[%s142 + $0x2c8] sm:$0xff]
        %v255 = vld [vmem:[%s142 + $0x2d0] sm:$0xff]
        %v256 = vld [vmem:[%s142 + $0x2d8] sm:$0xff]
        %v257 = vld [vmem:[%s142 + $0x2e0] sm:$0xff]
        %v258 = vld [vmem:[%s142 + $0x2e8] sm:$0xff]
        %v259 = vld [vmem:[%s142 + $0x2f0] sm:$0xff]
        %v260 = vld [vmem:[%s142 + $0x2f8] sm:$0xff]
        %v261 = vld [vmem:[%s142 + $0x300] sm:$0xff]
        %v262 = vld [vmem:[%s142 + $0x308] sm:$0xff]
        %v263 = vld [vmem:[%s142 + $0x310] sm:$0xff]
        %v264 = vld [vmem:[%s142 + $0x318] sm:$0xff]
        %v265 = vld [vmem:[%s142 + $0x320] sm:$0xff]
        %v266 = vld [vmem:[%s142 + $0x328] sm:$0xff]
        %v267 = vld [vmem:[%s142 + $0x330] sm:$0xff]
        %v268 = vld [vmem:[%s142 + $0x338] sm:$0xff]
        %v269 = vld [vmem:[%s142 + $0x340] sm:$0xff]
        %v270 = vld [vmem:[%s142 + $0x348] sm:$0xff]
        %v271 = vld [vmem:[%s142 + $0x350] sm:$0xff]
        %v272 = vld [vmem:[%s142 + $0x358] sm:$0xff]
        %v273 = vld [vmem:[%s142 + $0x360] sm:$0xff]
        %v274 = vld [vmem:[%s142 + $0x368] sm:$0xff]
        %v275 = vld [vmem:[%s142 + $0x370] sm:$0xff]
        %v276 = vld [vmem:[%s142 + $0x378] sm:$0xff]
        %v277 = vld [vmem:[%s142 + $0x380] sm:$0xff]
        %v278 = vld [vmem:[%s142 + $0x388] sm:$0xff]
        %v279 = vld [vmem:[%s142 + $0x390] sm:$0xff]
        %v280 = vld [vmem:[%s142 + $0x398] sm:$0xff]
        %v281 = vld [vmem:[%s142 + $0x3a0] sm:$0xff]
        %v282 = vld [vmem:[%s142 + $0x3a8] sm:$0xff]
        %v283 = vld [vmem:[%s142 + $0x3b0] sm:$0xff]
        %v284 = vld [vmem:[%s142 + $0x3b8] sm:$0xff]
        %v285 = vld [vmem:[%s142 + $0x3c0] sm:$0xff]
        %v286 = vld [vmem:[%s142 + $0x3c8] sm:$0xff]
        %v287 = vld [vmem:[%s142 + $0x3d0] sm:$0xff]
        %v288 = vld [vmem:[%s142 + $0x3d8] sm:$0xff]
        %v289 = vld [vmem:[%s142 + $0x3e0] sm:$0xff]
        %v290 = vld [vmem:[%s142 + $0x3e8] sm:$0xff]
        %v291 = vld [vmem:[%s142 + $0x3f0] sm:$0xff]
        %v292 = vld [vmem:[%s142 + $0x3f8] sm:$0xff]
        %v293 = vld [vmem:[%s142 + $0x400] sm:$0xff]
        %v294 = vld [vmem:[%s142 + $0x408] sm:$0xff]
        %v295 = vld [vmem:[%s142 + $0x410] sm:$0xff]
        %v296 = vld [vmem:[%s142 + $0x418] sm:$0xff]
        %v297 = vld [vmem:[%s142 + $0x420] sm:$0xff]
        %v298 = vld [vmem:[%s142 + $0x428] sm:$0xff]
        %v299 = vld [vmem:[%s142 + $0x430] sm:$0xff]
        %v300 = vld [vmem:[%s142 + $0x438] sm:$0xff]
        %v301 = vld [vmem:[%s142 + $0x440] sm:$0xff]
        %v302 = vld [vmem:[%s142 + $0x448] sm:$0xff]
        %v303 = vld [vmem:[%s142 + $0x450] sm:$0xff]
        %v304 = vld [vmem:[%s142 + $0x458] sm:$0xff]
        %v305 = vld [vmem:[%s142 + $0x460] sm:$0xff]
        %v306 = vld [vmem:[%s142 + $0x468] sm:$0xff]
        %v307 = vld [vmem:[%s142 + $0x470] sm:$0xff]
        %v308 = vld [vmem:[%s142 + $0x478] sm:$0xff]
        %v309 = vld [vmem:[%s142 + $0x480] sm:$0xff]
        %v310 = vld [vmem:[%s142 + $0x488] sm:$0xff]
        %v311 = vld [vmem:[%s142 + $0x490] sm:$0xff]
        %v312 = vld [vmem:[%s142 + $0x498] sm:$0xff]
        %v313 = vld [vmem:[%s142 + $0x4a0] sm:$0xff]
        %v314 = vld [vmem:[%s142 + $0x4a8] sm:$0xff]
        %v315 = vld [vmem:[%s142 + $0x4b0] sm:$0xff]
        %v316 = vld [vmem:[%s142 + $0x4b8] sm:$0xff]
        %v317 = vld [vmem:[%s142 + $0x4c0] sm:$0xff]
        %v318 = vld [vmem:[%s142 + $0x4c8] sm:$0xff]
        %v319 = vld [vmem:[%s142 + $0x4d0] sm:$0xff]
        %v320 = vld [vmem:[%s142 + $0x4d8] sm:$0xff]
        %v321 = vld [vmem:[%s142 + $0x4e0] sm:$0xff]
        %v322 = vld [vmem:[%s142 + $0x4e8] sm:$0xff]
        %v323 = vld [vmem:[%s142 + $0x4f0] sm:$0xff]
        %v324 = vld [vmem:[%s142 + $0x4f8] sm:$0xff]
        %v325 = vld [vmem:[%s142 + $0x500] sm:$0xff]
        %v326 = vld [vmem:[%s142 + $0x508] sm:$0xff]
        %v327 = vld [vmem:[%s142 + $0x510] sm:$0xff]
        %v328 = vld [vmem:[%s142 + $0x518] sm:$0xff]
        %v329 = vld [vmem:[%s142 + $0x520] sm:$0xff]
        %v330 = vld [vmem:[%s142 + $0x528] sm:$0xff]
        %v331 = vld [vmem:[%s142 + $0x530] sm:$0xff]
        %v332 = vld [vmem:[%s142 + $0x538] sm:$0xff]
        %v333 = vld [vmem:[%s142 + $0x540] sm:$0xff]
        %v334 = vld [vmem:[%s142 + $0x548] sm:$0xff]
        %v335 = vld [vmem:[%s142 + $0x550] sm:$0xff]
        %v336 = vld [vmem:[%s142 + $0x558] sm:$0xff]
        %v337 = vld [vmem:[%s142 + $0x560] sm:$0xff]
        %v338 = vld [vmem:[%s142 + $0x568] sm:$0xff]
        %v339 = vld [vmem:[%s142 + $0x570] sm:$0xff]
        %v340 = vld [vmem:[%s142 + $0x578] sm:$0xff]
        %v341 = vld [vmem:[%s142 + $0x580] sm:$0xff]
        %v342 = vld [vmem:[%s142 + $0x588] sm:$0xff]
        %v343 = vld [vmem:[%s142 + $0x590] sm:$0xff]
        %v344 = vld [vmem:[%s142 + $0x598] sm:$0xff]
        %v345 = vld [vmem:[%s142 + $0x5a0] sm:$0xff]
        %v346 = vld [vmem:[%s142 + $0x5a8] sm:$0xff]
        %v347 = vld [vmem:[%s142 + $0x5b0] sm:$0xff]
        %v348 = vld [vmem:[%s142 + $0x5b8] sm:$0xff]
        %v349 = vld [vmem:[%s142 + $0x5c0] sm:$0xff]
        %v350 = vld [vmem:[%s142 + $0x5c8] sm:$0xff]
        %v351 = vld [vmem:[%s142 + $0x5d0] sm:$0xff]
        %v352 = vld [vmem:[%s142 + $0x5d8] sm:$0xff]
        %v353 = vld [vmem:[%s142 + $0x5e0] sm:$0xff]
        %v354 = vld [vmem:[%s142 + $0x5e8] sm:$0xff]
        %v355 = vld [vmem:[%s142 + $0x5f0] sm:$0xff]
        %v356 = vld [vmem:[%s142 + $0x5f8] sm:$0xff]
        %v357 = vld [vmem:[%s142 + $0x600] sm:$0xff]
        %v358 = vld [vmem:[%s142 + $0x608] sm:$0xff]
        %v359 = vld [vmem:[%s142 + $0x610] sm:$0xff]
        %v360 = vld [vmem:[%s142 + $0x618] sm:$0xff]
        %v361 = vld [vmem:[%s142 + $0x620] sm:$0xff]
        %v362 = vld [vmem:[%s142 + $0x628] sm:$0xff]
        %v363 = vld [vmem:[%s142 + $0x630] sm:$0xff]
        %v364 = vld [vmem:[%s142 + $0x638] sm:$0xff]
        %v365 = vld [vmem:[%s142 + $0x640] sm:$0xff]
        %v366 = vld [vmem:[%s142 + $0x648] sm:$0xff]
        %v367 = vld [vmem:[%s142 + $0x650] sm:$0xff]
        %v368 = vld [vmem:[%s142 + $0x658] sm:$0xff]
        %v369 = vld [vmem:[%s142 + $0x660] sm:$0xff]
        %v370 = vld [vmem:[%s142 + $0x668] sm:$0xff]
        %v371 = vld [vmem:[%s142 + $0x670] sm:$0xff]
        %v372 = vld [vmem:[%s142 + $0x678] sm:$0xff]
        %v373 = vld [vmem:[%s142 + $0x680] sm:$0xff]
        %v374 = vld [vmem:[%s142 + $0x688] sm:$0xff]
        %v375 = vld [vmem:[%s142 + $0x690] sm:$0xff]
        %v376 = vld [vmem:[%s142 + $0x698] sm:$0xff]
        %v377 = vld [vmem:[%s142 + $0x6a0] sm:$0xff]
        %v378 = vld [vmem:[%s142 + $0x6a8] sm:$0xff]
        %v379 = vld [vmem:[%s142 + $0x6b0] sm:$0xff]
        %v380 = vld [vmem:[%s142 + $0x6b8] sm:$0xff]
        %v381 = vld [vmem:[%s142 + $0x6c0] sm:$0xff]
        %v382 = vld [vmem:[%s142 + $0x6c8] sm:$0xff]
        %v383 = vld [vmem:[%s142 + $0x6d0] sm:$0xff]
        %v384 = vld [vmem:[%s142 + $0x6d8] sm:$0xff]
        %v385 = vld [vmem:[%s142 + $0x6e0] sm:$0xff]
        %v386 = vld [vmem:[%s142 + $0x6e8] sm:$0xff]
        %v387 = vld [vmem:[%s142 + $0x6f0] sm:$0xff]
        %v388 = vld [vmem:[%s142 + $0x6f8] sm:$0xff]
        %v389 = vld [vmem:[%s142 + $0x700] sm:$0xff]
        %v390 = vld [vmem:[%s142 + $0x708] sm:$0xff]
        %v391 = vld [vmem:[%s142 + $0x710] sm:$0xff]
        %v392 = vld [vmem:[%s142 + $0x718] sm:$0xff]
        %v393 = vld [vmem:[%s142 + $0x720] sm:$0xff]
        %v394 = vld [vmem:[%s142 + $0x728] sm:$0xff]
        %v395 = vld [vmem:[%s142 + $0x730] sm:$0xff]
        %v396 = vld [vmem:[%s142 + $0x738] sm:$0xff]
        %v397 = vld [vmem:[%s142 + $0x740] sm:$0xff]
        %v398 = vld [vmem:[%s142 + $0x748] sm:$0xff]
        %v399 = vld [vmem:[%s142 + $0x750] sm:$0xff]
        %v400 = vld [vmem:[%s142 + $0x758] sm:$0xff]
        %v401 = vld [vmem:[%s142 + $0x760] sm:$0xff]
        %v402 = vld [vmem:[%s142 + $0x768] sm:$0xff]
        %v403 = vld [vmem:[%s142 + $0x770] sm:$0xff]
        %v404 = vld [vmem:[%s142 + $0x778] sm:$0xff]
        %v405 = vld [vmem:[%s142 + $0x780] sm:$0xff]
        %v406 = vld [vmem:[%s142 + $0x788] sm:$0xff]
        %v407 = vld [vmem:[%s142 + $0x790] sm:$0xff]
        %v408 = vld [vmem:[%s142 + $0x798] sm:$0xff]
        %v409 = vld [vmem:[%s142 + $0x7a0] sm:$0xff]
        %v410 = vld [vmem:[%s142 + $0x7a8] sm:$0xff]
        %v411 = vld [vmem:[%s142 + $0x7b0] sm:$0xff]
        %v412 = vld [vmem:[%s142 + $0x7b8] sm:$0xff]
        %v413 = vld [vmem:[%s142 + $0x7c0] sm:$0xff]
        %v414 = vld [vmem:[%s142 + $0x7c8] sm:$0xff]
        %v415 = vld [vmem:[%s142 + $0x7d0] sm:$0xff]
        %v416 = vld [vmem:[%s142 + $0x7d8] sm:$0xff]
        %v417 = vld [vmem:[%s142 + $0x7e0] sm:$0xff]
        %v418 = vld [vmem:[%s142 + $0x7e8] sm:$0xff]
        %v419 = vld [vmem:[%s142 + $0x7f0] sm:$0xff]
        %v420 = vld [vmem:[%s142 + $0x7f8] sm:$0xff]
        %v421 = vld [vmem:[%s142 + $0x800] sm:$0xff]
        %v422 = vld [vmem:[%s142 + $0x808] sm:$0xff]
        %v423 = vld [vmem:[%s142 + $0x810] sm:$0xff]
        %v424 = vld [vmem:[%s142 + $0x818] sm:$0xff]
        %v425 = vld [vmem:[%s142 + $0x820] sm:$0xff]
        %v426 = vld [vmem:[%s142 + $0x828] sm:$0xff]
        %v427 = vld [vmem:[%s142 + $0x830] sm:$0xff]
        %v428 = vld [vmem:[%s142 + $0x838] sm:$0xff]
        %v429 = vld [vmem:[%s142 + $0x840] sm:$0xff]
        %v430 = vld [vmem:[%s142 + $0x848] sm:$0xff]
        %v431 = vld [vmem:[%s142 + $0x850] sm:$0xff]
        %v432 = vld [vmem:[%s142 + $0x858] sm:$0xff]
        %v433 = vld [vmem:[%s142 + $0x860] sm:$0xff]
        %v434 = vld [vmem:[%s142 + $0x868] sm:$0xff]
        %v435 = vld [vmem:[%s142 + $0x870] sm:$0xff]
        %v436 = vld [vmem:[%s142 + $0x878] sm:$0xff]
        %v437 = vld [vmem:[%s142 + $0x880] sm:$0xff]
        %v438 = vld [vmem:[%s142 + $0x888] sm:$0xff]
        %v439 = vld [vmem:[%s142 + $0x890] sm:$0xff]
        %v440 = vld [vmem:[%s142 + $0x898] sm:$0xff]
        %v441 = vld [vmem:[%s142 + $0x8a0] sm:$0xff]
        %v442 = vld [vmem:[%s142 + $0x8a8] sm:$0xff]
        %v443 = vld [vmem:[%s142 + $0x8b0] sm:$0xff]
        %v444 = vld [vmem:[%s142 + $0x8b8] sm:$0xff]
        %v445 = vld [vmem:[%s142 + $0x8c0] sm:$0xff]
        %v446 = vld [vmem:[%s142 + $0x8c8] sm:$0xff]
        %v447 = vld [vmem:[%s142 + $0x8d0] sm:$0xff]
        %v448 = vld [vmem:[%s142 + $0x8d8] sm:$0xff]
        %v449 = vld [vmem:[%s142 + $0x8e0] sm:$0xff]
        %v450 = vld [vmem:[%s142 + $0x8e8] sm:$0xff]
        %v451 = vld [vmem:[%s142 + $0x8f0] sm:$0xff]
        %v452 = vld [vmem:[%s142 + $0x8f8] sm:$0xff]
        %v453 = vld [vmem:[%s142 + $0x900] sm:$0xff]
        %v454 = vld [vmem:[%s142 + $0x908] sm:$0xff]
        %v455 = vld [vmem:[%s142 + $0x910] sm:$0xff]
        %v456 = vld [vmem:[%s142 + $0x918] sm:$0xff]
        %v457 = vld [vmem:[%s142 + $0x920] sm:$0xff]
        %v458 = vld [vmem:[%s142 + $0x928] sm:$0xff]
        %v459 = vld [vmem:[%s142 + $0x930] sm:$0xff]
        %v460 = vld [vmem:[%s142 + $0x938] sm:$0xff]
        %v461 = vld [vmem:[%s142 + $0x940] sm:$0xff]
        %v462 = vld [vmem:[%s142 + $0x948] sm:$0xff]
        %v463 = vld [vmem:[%s142 + $0x950] sm:$0xff]
        %v464 = vld [vmem:[%s142 + $0x958] sm:$0xff]
        %v465 = vld [vmem:[%s142 + $0x960] sm:$0xff]
        %v466 = vld [vmem:[%s142 + $0x968] sm:$0xff]
        %v467 = vld [vmem:[%s142 + $0x970] sm:$0xff]
        %v468 = vld [vmem:[%s142 + $0x978] sm:$0xff]
        %v469 = vld [vmem:[%s142 + $0x980] sm:$0xff]
        %v470 = vld [vmem:[%s142 + $0x988] sm:$0xff]
        %v471 = vld [vmem:[%s142 + $0x990] sm:$0xff]
        %v472 = vld [vmem:[%s142 + $0x998] sm:$0xff]
        %v473 = vld [vmem:[%s142 + $0x9a0] sm:$0xff]
        %v474 = vld [vmem:[%s142 + $0x9a8] sm:$0xff]
        %v475 = vld [vmem:[%s142 + $0x9b0] sm:$0xff]
        %v476 = vld [vmem:[%s142 + $0x9b8] sm:$0xff]
        %v477 = vld [vmem:[%s142 + $0x9c0] sm:$0xff]
        %v478 = vld [vmem:[%s142 + $0x9c8] sm:$0xff]
        %v479 = vld [vmem:[%s142 + $0x9d0] sm:$0xff]
        %v480 = vld [vmem:[%s142 + $0x9d8] sm:$0xff]
        %v481 = vld [vmem:[%s142 + $0x9e0] sm:$0xff]
        %v482 = vld [vmem:[%s142 + $0x9e8] sm:$0xff]
        %v483 = vld [vmem:[%s142 + $0x9f0] sm:$0xff]
        %v484 = vld [vmem:[%s142 + $0x9f8] sm:$0xff]
        %v485 = vld [vmem:[%s142 + $0xa00] sm:$0xff]
        %v486 = vld [vmem:[%s142 + $0xa08] sm:$0xff]
        %v487 = vld [vmem:[%s142 + $0xa10] sm:$0xff]
        %v488 = vld [vmem:[%s142 + $0xa18] sm:$0xff]
        %v489 = vld [vmem:[%s142 + $0xa20] sm:$0xff]
        %v490 = vld [vmem:[%s142 + $0xa28] sm:$0xff]
        %v491 = vld [vmem:[%s142 + $0xa30] sm:$0xff]
        %v492 = vld [vmem:[%s142 + $0xa38] sm:$0xff]
        %v493 = vld [vmem:[%s142 + $0xa40] sm:$0xff]
        %v494 = vld [vmem:[%s142 + $0xa48] sm:$0xff]
        %v495 = vld [vmem:[%s142 + $0xa50] sm:$0xff]
        %v496 = vld [vmem:[%s142 + $0xa58] sm:$0xff]
        %v497 = vld [vmem:[%s142 + $0xa60] sm:$0xff]
        %v498 = vld [vmem:[%s142 + $0xa68] sm:$0xff]
        %v499 = vld [vmem:[%s142 + $0xa70] sm:$0xff]
        %v500 = vld [vmem:[%s142 + $0xa78] sm:$0xff]
        %v501 = vld [vmem:[%s142 + $0xa80] sm:$0xff]
        %v502 = vld [vmem:[%s142 + $0xa88] sm:$0xff]
        %v503 = vld [vmem:[%s142 + $0xa90] sm:$0xff]
        %v504 = vld [vmem:[%s142 + $0xa98] sm:$0xff]
        %v505 = vld [vmem:[%s142 + $0xaa0] sm:$0xff]
        %v506 = vld [vmem:[%s142 + $0xaa8] sm:$0xff]
        %v507 = vld [vmem:[%s142 + $0xab0] sm:$0xff]
        %v508 = vld [vmem:[%s142 + $0xab8] sm:$0xff]
        %v509 = vld [vmem:[%s142 + $0xac0] sm:$0xff]
        %v510 = vld [vmem:[%s142 + $0xac8] sm:$0xff]
        %v511 = vld [vmem:[%s142 + $0xad0] sm:$0xff]
        %v512 = vld [vmem:[%s142 + $0xad8] sm:$0xff]
        %v513 = vld [vmem:[%s142 + $0xae0] sm:$0xff]
        %v514 = vld [vmem:[%s142 + $0xae8] sm:$0xff]
        %v515 = vld [vmem:[%s142 + $0xaf0] sm:$0xff]
        %v516 = vld [vmem:[%s142 + $0xaf8] sm:$0xff]
        %v517 = vld [vmem:[%s142 + $0xb00] sm:$0xff]
        %v518 = vld [vmem:[%s142 + $0xb08] sm:$0xff]
        %v519 = vld [vmem:[%s142 + $0xb10] sm:$0xff]
        %v520 = vld [vmem:[%s142 + $0xb18] sm:$0xff]
        %v521 = vld [vmem:[%s142 + $0xb20] sm:$0xff]
        %v522 = vld [vmem:[%s142 + $0xb28] sm:$0xff]
        %v523 = vld [vmem:[%s142 + $0xb30] sm:$0xff]
        %v524 = vld [vmem:[%s142 + $0xb38] sm:$0xff]
        %v525 = vld [vmem:[%s142 + $0xb40] sm:$0xff]
        %v526 = vld [vmem:[%s142 + $0xb48] sm:$0xff]
        %v527 = vld [vmem:[%s142 + $0xb50] sm:$0xff]
        %v528 = vld [vmem:[%s142 + $0xb58] sm:$0xff]
        %v529 = vld [vmem:[%s142 + $0xb60] sm:$0xff]
        %v530 = vld [vmem:[%s142 + $0xb68] sm:$0xff]
        %v531 = vld [vmem:[%s142 + $0xb70] sm:$0xff]
        %v532 = vld [vmem:[%s142 + $0xb78] sm:$0xff]
        %v533 = vld [vmem:[%s142 + $0xb80] sm:$0xff]
        %v534 = vld [vmem:[%s142 + $0xb88] sm:$0xff]
        %v535 = vld [vmem:[%s142 + $0xb90] sm:$0xff]
        %v536 = vld [vmem:[%s142 + $0xb98] sm:$0xff]
        %v537 = vld [vmem:[%s142 + $0xba0] sm:$0xff]
        %v538 = vld [vmem:[%s142 + $0xba8] sm:$0xff]
        %v539 = vld [vmem:[%s142 + $0xbb0] sm:$0xff]
        %v540 = vld [vmem:[%s142 + $0xbb8] sm:$0xff]
        %v541 = vld [vmem:[%s142 + $0xbc0] sm:$0xff]
        %v542 = vld [vmem:[%s142 + $0xbc8] sm:$0xff]
        %v543 = vld [vmem:[%s142 + $0xbd0] sm:$0xff]
        %v544 = vld [vmem:[%s142 + $0xbd8] sm:$0xff]
        %v545 = vld [vmem:[%s142 + $0xbe0] sm:$0xff]
        %v546 = vld [vmem:[%s142 + $0xbe8] sm:$0xff]
        %v547 = vld [vmem:[%s142 + $0xbf0] sm:$0xff]
        %v548 = vld [vmem:[%s142 + $0xbf8] sm:$0xff]
        %v549 = vld [vmem:[%s142 + $0xc00] sm:$0xff]
        %v550 = vld [vmem:[%s142 + $0xc08] sm:$0xff]
        %v551 = vld [vmem:[%s142 + $0xc10] sm:$0xff]
        %v552 = vld [vmem:[%s142 + $0xc18] sm:$0xff]
        %v553 = vld [vmem:[%s142 + $0xc20] sm:$0xff]
        %v554 = vld [vmem:[%s142 + $0xc28] sm:$0xff]
        %v555 = vld [vmem:[%s142 + $0xc30] sm:$0xff]
        %v556 = vld [vmem:[%s142 + $0xc38] sm:$0xff]
        %v557 = vld [vmem:[%s142 + $0xc40] sm:$0xff]
        %v558 = vld [vmem:[%s142 + $0xc48] sm:$0xff]
        %v559 = vld [vmem:[%s142 + $0xc50] sm:$0xff]
        %v560 = vld [vmem:[%s142 + $0xc58] sm:$0xff]
        %v561 = vld [vmem:[%s142 + $0xc60] sm:$0xff]
        %v562 = vld [vmem:[%s142 + $0xc68] sm:$0xff]
        %v563 = vld [vmem:[%s142 + $0xc70] sm:$0xff]
        %v564 = vld [vmem:[%s142 + $0xc78] sm:$0xff]
        %v565 = vld [vmem:[%s142 + $0xc80] sm:$0xff]
        %v566 = vld [vmem:[%s142 + $0xc88] sm:$0xff]
        %v567 = vld [vmem:[%s142 + $0xc90] sm:$0xff]
        %v568 = vld [vmem:[%s142 + $0xc98] sm:$0xff]
        %v569 = vld [vmem:[%s142 + $0xca0] sm:$0xff]
        %v570 = vld [vmem:[%s142 + $0xca8] sm:$0xff]
        %v571 = vld [vmem:[%s142 + $0xcb0] sm:$0xff]
        %v572 = vld [vmem:[%s142 + $0xcb8] sm:$0xff]
        %v573 = vld [vmem:[%s142 + $0xcc0] sm:$0xff]
        %v574 = vld [vmem:[%s142 + $0xcc8] sm:$0xff]
        %v575 = vld [vmem:[%s142 + $0xcd0] sm:$0xff]
        %v576 = vld [vmem:[%s142 + $0xcd8] sm:$0xff]
        %v577 = vld [vmem:[%s142 + $0xce0] sm:$0xff]
        %v578 = vld [vmem:[%s142 + $0xce8] sm:$0xff]
        %v579 = vld [vmem:[%s142 + $0xcf0] sm:$0xff]
        %v580 = vld [vmem:[%s142 + $0xcf8] sm:$0xff]
        %v581 = vld [vmem:[%s142 + $0xd00] sm:$0xff]
        %v582 = vld [vmem:[%s142 + $0xd08] sm:$0xff]
        %v583 = vld [vmem:[%s142 + $0xd10] sm:$0xff]
        %v584 = vld [vmem:[%s142 + $0xd18] sm:$0xff]
        %v585 = vld [vmem:[%s142 + $0xd20] sm:$0xff]
        %v586 = vld [vmem:[%s142 + $0xd28] sm:$0xff]
        %v587 = vld [vmem:[%s142 + $0xd30] sm:$0xff]
        %v588 = vld [vmem:[%s142 + $0xd38] sm:$0xff]
        %v589 = vld [vmem:[%s142 + $0xd40] sm:$0xff]
        %v590 = vld [vmem:[%s142 + $0xd48] sm:$0xff]
        %v591 = vld [vmem:[%s142 + $0xd50] sm:$0xff]
        %v592 = vld [vmem:[%s142 + $0xd58] sm:$0xff]
        %v593 = vld [vmem:[%s142 + $0xd60] sm:$0xff]
        %v594 = vld [vmem:[%s142 + $0xd68] sm:$0xff]
        %v595 = vld [vmem:[%s142 + $0xd70] sm:$0xff]
        %v596 = vld [vmem:[%s142 + $0xd78] sm:$0xff]
        %v597 = vld [vmem:[%s1] sm:$0x7]
        %v599 = vlaneseq
        %v600 = vshrl.u32 %v599, 7
        %v601 = vsub.s32 0, %v600
        %v602 = vrot.slane %v597, %v601
        %v603 = vlaneseq
        %v604 = vshrl.u32 %v603, 7
        %v605 = vsub.s32 1, %v604
        %v606 = vrot.slane %v597, %v605
        %v607 = vlaneseq
        %v608 = vshrl.u32 %v607, 7
        %v609 = vsub.s32 2, %v608
        %v610 = vrot.slane %v597, %v609
        %v614 = vadd.f32 %v165, %v602
        %v615 = vadd.f32 %v166, %v606
        %v616 = vadd.f32 %v167, %v610
        %v617 = vadd.f32 %v168, %v602
        %v618 = vadd.f32 %v169, %v606
        %v619 = vadd.f32 %v170, %v610
        %v620 = vadd.f32 %v171, %v602
        %v621 = vadd.f32 %v172, %v606
        %v622 = vadd.f32 %v173, %v610
        %v623 = vadd.f32 %v174, %v602
        %v624 = vadd.f32 %v175, %v606
        %v625 = vadd.f32 %v176, %v610
        %v626 = vadd.f32 %v177, %v602
        %v627 = vadd.f32 %v178, %v606
        %v628 = vadd.f32 %v179, %v610
        %v629 = vadd.f32 %v180, %v602
        %v630 = vadd.f32 %v181, %v606
        %v631 = vadd.f32 %v182, %v610
        %v632 = vadd.f32 %v183, %v602
        %v633 = vadd.f32 %v184, %v606
        %v634 = vadd.f32 %v185, %v610
        %v635 = vadd.f32 %v186, %v602
        %v636 = vadd.f32 %v187, %v606
        %v637 = vadd.f32 %v188, %v610
        %v638 = vadd.f32 %v189, %v602
        %v639 = vadd.f32 %v190, %v606
        %v640 = vadd.f32 %v191, %v610
        %v641 = vadd.f32 %v192, %v602
        %v642 = vadd.f32 %v193, %v606
        %v643 = vadd.f32 %v194, %v610
        %v644 = vadd.f32 %v195, %v602
        %v645 = vadd.f32 %v196, %v606
        %v646 = vadd.f32 %v197, %v610
        %v647 = vadd.f32 %v198, %v602
        %v648 = vadd.f32 %v199, %v606
        %v649 = vadd.f32 %v200, %v610
        %v650 = vadd.f32 %v201, %v602
        %v651 = vadd.f32 %v202, %v606
        %v652 = vadd.f32 %v203, %v610
        %v653 = vadd.f32 %v204, %v602
        %v654 = vadd.f32 %v205, %v606
        %v655 = vadd.f32 %v206, %v610
        %v656 = vadd.f32 %v207, %v602
        %v657 = vadd.f32 %v208, %v606
        %v658 = vadd.f32 %v209, %v610
        %v659 = vadd.f32 %v210, %v602
        %v660 = vadd.f32 %v211, %v606
        %v661 = vadd.f32 %v212, %v610
        %v662 = vadd.f32 %v213, %v602
        %v663 = vadd.f32 %v214, %v606
        %v664 = vadd.f32 %v215, %v610
        %v665 = vadd.f32 %v216, %v602
        %v666 = vadd.f32 %v217, %v606
        %v667 = vadd.f32 %v218, %v610
        %v668 = vadd.f32 %v219, %v602
        %v669 = vadd.f32 %v220, %v606
        %v670 = vadd.f32 %v221, %v610
        %v671 = vadd.f32 %v222, %v602
        %v672 = vadd.f32 %v223, %v606
        %v673 = vadd.f32 %v224, %v610
        %v674 = vadd.f32 %v225, %v602
        %v675 = vadd.f32 %v226, %v606
        %v676 = vadd.f32 %v227, %v610
        %v677 = vadd.f32 %v228, %v602
        %v678 = vadd.f32 %v229, %v606
        %v679 = vadd.f32 %v230, %v610
        %v680 = vadd.f32 %v231, %v602
        %v681 = vadd.f32 %v232, %v606
        %v682 = vadd.f32 %v233, %v610
        %v683 = vadd.f32 %v234, %v602
        %v684 = vadd.f32 %v235, %v606
        %v685 = vadd.f32 %v236, %v610
        %v686 = vadd.f32 %v237, %v602
        %v687 = vadd.f32 %v238, %v606
        %v688 = vadd.f32 %v239, %v610
        %v689 = vadd.f32 %v240, %v602
        %v690 = vadd.f32 %v241, %v606
        %v691 = vadd.f32 %v242, %v610
        %v692 = vadd.f32 %v243, %v602
        %v693 = vadd.f32 %v244, %v606
        %v694 = vadd.f32 %v245, %v610
        %v695 = vadd.f32 %v246, %v602
        %v696 = vadd.f32 %v247, %v606
        %v697 = vadd.f32 %v248, %v610
        %v698 = vadd.f32 %v249, %v602
        %v699 = vadd.f32 %v250, %v606
        %v700 = vadd.f32 %v251, %v610
        %v701 = vadd.f32 %v252, %v602
        %v702 = vadd.f32 %v253, %v606
        %v703 = vadd.f32 %v254, %v610
        %v704 = vadd.f32 %v255, %v602
        %v705 = vadd.f32 %v256, %v606
        %v706 = vadd.f32 %v257, %v610
        %v707 = vadd.f32 %v258, %v602
        %v708 = vadd.f32 %v259, %v606
        %v709 = vadd.f32 %v260, %v610
        %v710 = vadd.f32 %v261, %v602
        %v711 = vadd.f32 %v262, %v606
        %v712 = vadd.f32 %v263, %v610
        %v713 = vadd.f32 %v264, %v602
        %v714 = vadd.f32 %v265, %v606
        %v715 = vadd.f32 %v266, %v610
        %v716 = vadd.f32 %v267, %v602
        %v717 = vadd.f32 %v268, %v606
        %v718 = vadd.f32 %v269, %v610
        %v719 = vadd.f32 %v270, %v602
        %v720 = vadd.f32 %v271, %v606
        %v721 = vadd.f32 %v272, %v610
        %v722 = vadd.f32 %v273, %v602
        %v723 = vadd.f32 %v274, %v606
        %v724 = vadd.f32 %v275, %v610
        %v725 = vadd.f32 %v276, %v602
        %v726 = vadd.f32 %v277, %v606
        %v727 = vadd.f32 %v278, %v610
        %v728 = vadd.f32 %v279, %v602
        %v729 = vadd.f32 %v280, %v606
        %v730 = vadd.f32 %v281, %v610
        %v731 = vadd.f32 %v282, %v602
        %v732 = vadd.f32 %v283, %v606
        %v733 = vadd.f32 %v284, %v610
        %v734 = vadd.f32 %v285, %v602
        %v735 = vadd.f32 %v286, %v606
        %v736 = vadd.f32 %v287, %v610
        %v737 = vadd.f32 %v288, %v602
        %v738 = vadd.f32 %v289, %v606
        %v739 = vadd.f32 %v290, %v610
        %v740 = vadd.f32 %v291, %v602
        %v741 = vadd.f32 %v292, %v606
        %v742 = vadd.f32 %v293, %v610
        %v743 = vadd.f32 %v294, %v602
        %v744 = vadd.f32 %v295, %v606
        %v745 = vadd.f32 %v296, %v610
        %v746 = vadd.f32 %v297, %v602
        %v747 = vadd.f32 %v298, %v606
        %v748 = vadd.f32 %v299, %v610
        %v749 = vadd.f32 %v300, %v602
        %v750 = vadd.f32 %v301, %v606
        %v751 = vadd.f32 %v302, %v610
        %v752 = vadd.f32 %v303, %v602
        %v753 = vadd.f32 %v304, %v606
        %v754 = vadd.f32 %v305, %v610
        %v755 = vadd.f32 %v306, %v602
        %v756 = vadd.f32 %v307, %v606
        %v757 = vadd.f32 %v308, %v610
        %v758 = vadd.f32 %v309, %v602
        %v759 = vadd.f32 %v310, %v606
        %v760 = vadd.f32 %v311, %v610
        %v761 = vadd.f32 %v312, %v602
        %v762 = vadd.f32 %v313, %v606
        %v763 = vadd.f32 %v314, %v610
        %v764 = vadd.f32 %v315, %v602
        %v765 = vadd.f32 %v316, %v606
        %v766 = vadd.f32 %v317, %v610
        %v767 = vadd.f32 %v318, %v602
        %v768 = vadd.f32 %v319, %v606
        %v769 = vadd.f32 %v320, %v610
        %v770 = vadd.f32 %v321, %v602
        %v771 = vadd.f32 %v322, %v606
        %v772 = vadd.f32 %v323, %v610
        %v773 = vadd.f32 %v324, %v602
        %v774 = vadd.f32 %v325, %v606
        %v775 = vadd.f32 %v326, %v610
        %v776 = vadd.f32 %v327, %v602
        %v777 = vadd.f32 %v328, %v606
        %v778 = vadd.f32 %v329, %v610
        %v779 = vadd.f32 %v330, %v602
        %v780 = vadd.f32 %v331, %v606
        %v781 = vadd.f32 %v332, %v610
        %v782 = vadd.f32 %v333, %v602
        %v783 = vadd.f32 %v334, %v606
        %v784 = vadd.f32 %v335, %v610
        %v785 = vadd.f32 %v336, %v602
        %v786 = vadd.f32 %v337, %v606
        %v787 = vadd.f32 %v338, %v610
        %v788 = vadd.f32 %v339, %v602
        %v789 = vadd.f32 %v340, %v606
        %v790 = vadd.f32 %v341, %v610
        %v791 = vadd.f32 %v342, %v602
        %v792 = vadd.f32 %v343, %v606
        %v793 = vadd.f32 %v344, %v610
        %v794 = vadd.f32 %v345, %v602
        %v795 = vadd.f32 %v346, %v606
        %v796 = vadd.f32 %v347, %v610
        %v797 = vadd.f32 %v348, %v602
        %v798 = vadd.f32 %v349, %v606
        %v799 = vadd.f32 %v350, %v610
        %v800 = vadd.f32 %v351, %v602
        %v801 = vadd.f32 %v352, %v606
        %v802 = vadd.f32 %v353, %v610
        %v803 = vadd.f32 %v354, %v602
        %v804 = vadd.f32 %v355, %v606
        %v805 = vadd.f32 %v356, %v610
        %v806 = vadd.f32 %v357, %v602
        %v807 = vadd.f32 %v358, %v606
        %v808 = vadd.f32 %v359, %v610
        %v809 = vadd.f32 %v360, %v602
        %v810 = vadd.f32 %v361, %v606
        %v811 = vadd.f32 %v362, %v610
        %v812 = vadd.f32 %v363, %v602
        %v813 = vadd.f32 %v364, %v606
        %v814 = vadd.f32 %v365, %v610
        %v815 = vadd.f32 %v366, %v602
        %v816 = vadd.f32 %v367, %v606
        %v817 = vadd.f32 %v368, %v610
        %v818 = vadd.f32 %v369, %v602
        %v819 = vadd.f32 %v370, %v606
        %v820 = vadd.f32 %v371, %v610
        %v821 = vadd.f32 %v372, %v602
        %v822 = vadd.f32 %v373, %v606
        %v823 = vadd.f32 %v374, %v610
        %v824 = vadd.f32 %v375, %v602
        %v825 = vadd.f32 %v376, %v606
        %v826 = vadd.f32 %v377, %v610
        %v827 = vadd.f32 %v378, %v602
        %v828 = vadd.f32 %v379, %v606
        %v829 = vadd.f32 %v380, %v610
        %v830 = vadd.f32 %v381, %v602
        %v831 = vadd.f32 %v382, %v606
        %v832 = vadd.f32 %v383, %v610
        %v833 = vadd.f32 %v384, %v602
        %v834 = vadd.f32 %v385, %v606
        %v835 = vadd.f32 %v386, %v610
        %v836 = vadd.f32 %v387, %v602
        %v837 = vadd.f32 %v388, %v606
        %v838 = vadd.f32 %v389, %v610
        %v839 = vadd.f32 %v390, %v602
        %v840 = vadd.f32 %v391, %v606
        %v841 = vadd.f32 %v392, %v610
        %v842 = vadd.f32 %v393, %v602
        %v843 = vadd.f32 %v394, %v606
        %v844 = vadd.f32 %v395, %v610
        %v845 = vadd.f32 %v396, %v602
        %v846 = vadd.f32 %v397, %v606
        %v847 = vadd.f32 %v398, %v610
        %v848 = vadd.f32 %v399, %v602
        %v849 = vadd.f32 %v400, %v606
        %v850 = vadd.f32 %v401, %v610
        %v851 = vadd.f32 %v402, %v602
        %v852 = vadd.f32 %v403, %v606
        %v853 = vadd.f32 %v404, %v610
        %v854 = vadd.f32 %v405, %v602
        %v855 = vadd.f32 %v406, %v606
        %v856 = vadd.f32 %v407, %v610
        %v857 = vadd.f32 %v408, %v602
        %v858 = vadd.f32 %v409, %v606
        %v859 = vadd.f32 %v410, %v610
        %v860 = vadd.f32 %v411, %v602
        %v861 = vadd.f32 %v412, %v606
        %v862 = vadd.f32 %v413, %v610
        %v863 = vadd.f32 %v414, %v602
        %v864 = vadd.f32 %v415, %v606
        %v865 = vadd.f32 %v416, %v610
        %v866 = vadd.f32 %v417, %v602
        %v867 = vadd.f32 %v418, %v606
        %v868 = vadd.f32 %v419, %v610
        %v869 = vadd.f32 %v420, %v602
        %v870 = vadd.f32 %v421, %v606
        %v871 = vadd.f32 %v422, %v610
        %v872 = vadd.f32 %v423, %v602
        %v873 = vadd.f32 %v424, %v606
        %v874 = vadd.f32 %v425, %v610
        %v875 = vadd.f32 %v426, %v602
        %v876 = vadd.f32 %v427, %v606
        %v877 = vadd.f32 %v428, %v610
        %v878 = vadd.f32 %v429, %v602
        %v879 = vadd.f32 %v430, %v606
        %v880 = vadd.f32 %v431, %v610
        %v881 = vadd.f32 %v432, %v602
        %v882 = vadd.f32 %v433, %v606
        %v883 = vadd.f32 %v434, %v610
        %v884 = vadd.f32 %v435, %v602
        %v885 = vadd.f32 %v436, %v606
        %v886 = vadd.f32 %v437, %v610
        %v887 = vadd.f32 %v438, %v602
        %v888 = vadd.f32 %v439, %v606
        %v889 = vadd.f32 %v440, %v610
        %v890 = vadd.f32 %v441, %v602
        %v891 = vadd.f32 %v442, %v606
        %v892 = vadd.f32 %v443, %v610
        %v893 = vadd.f32 %v444, %v602
        %v894 = vadd.f32 %v445, %v606
        %v895 = vadd.f32 %v446, %v610
        %v896 = vadd.f32 %v447, %v602
        %v897 = vadd.f32 %v448, %v606
        %v898 = vadd.f32 %v449, %v610
        %v899 = vadd.f32 %v450, %v602
        %v900 = vadd.f32 %v451, %v606
        %v901 = vadd.f32 %v452, %v610
        %v902 = vadd.f32 %v453, %v602
        %v903 = vadd.f32 %v454, %v606
        %v904 = vadd.f32 %v455, %v610
        %v905 = vadd.f32 %v456, %v602
        %v906 = vadd.f32 %v457, %v606
        %v907 = vadd.f32 %v458, %v610
        %v908 = vadd.f32 %v459, %v602
        %v909 = vadd.f32 %v460, %v606
        %v910 = vadd.f32 %v461, %v610
        %v911 = vadd.f32 %v462, %v602
        %v912 = vadd.f32 %v463, %v606
        %v913 = vadd.f32 %v464, %v610
        %v914 = vadd.f32 %v465, %v602
        %v915 = vadd.f32 %v466, %v606
        %v916 = vadd.f32 %v467, %v610
        %v917 = vadd.f32 %v468, %v602
        %v918 = vadd.f32 %v469, %v606
        %v919 = vadd.f32 %v470, %v610
        %v920 = vadd.f32 %v471, %v602
        %v921 = vadd.f32 %v472, %v606
        %v922 = vadd.f32 %v473, %v610
        %v923 = vadd.f32 %v474, %v602
        %v924 = vadd.f32 %v475, %v606
        %v925 = vadd.f32 %v476, %v610
        %v926 = vadd.f32 %v477, %v602
        %v927 = vadd.f32 %v478, %v606
        %v928 = vadd.f32 %v479, %v610
        %v929 = vadd.f32 %v480, %v602
        %v930 = vadd.f32 %v481, %v606
        %v931 = vadd.f32 %v482, %v610
        %v932 = vadd.f32 %v483, %v602
        %v933 = vadd.f32 %v484, %v606
        %v934 = vadd.f32 %v485, %v610
        %v935 = vadd.f32 %v486, %v602
        %v936 = vadd.f32 %v487, %v606
        %v937 = vadd.f32 %v488, %v610
        %v938 = vadd.f32 %v489, %v602
        %v939 = vadd.f32 %v490, %v606
        %v940 = vadd.f32 %v491, %v610
        %v941 = vadd.f32 %v492, %v602
        %v942 = vadd.f32 %v493, %v606
        %v943 = vadd.f32 %v494, %v610
        %v944 = vadd.f32 %v495, %v602
        %v945 = vadd.f32 %v496, %v606
        %v946 = vadd.f32 %v497, %v610
        %v947 = vadd.f32 %v498, %v602
        %v948 = vadd.f32 %v499, %v606
        %v949 = vadd.f32 %v500, %v610
        %v950 = vadd.f32 %v501, %v602
        %v951 = vadd.f32 %v502, %v606
        %v952 = vadd.f32 %v503, %v610
        %v953 = vadd.f32 %v504, %v602
        %v954 = vadd.f32 %v505, %v606
        %v955 = vadd.f32 %v506, %v610
        %v956 = vadd.f32 %v507, %v602
        %v957 = vadd.f32 %v508, %v606
        %v958 = vadd.f32 %v509, %v610
        %v959 = vadd.f32 %v510, %v602
        %v960 = vadd.f32 %v511, %v606
        %v961 = vadd.f32 %v512, %v610
        %v962 = vadd.f32 %v513, %v602
        %v963 = vadd.f32 %v514, %v606
        %v964 = vadd.f32 %v515, %v610
        %v965 = vadd.f32 %v516, %v602
        %v966 = vadd.f32 %v517, %v606
        %v967 = vadd.f32 %v518, %v610
        %v968 = vadd.f32 %v519, %v602
        %v969 = vadd.f32 %v520, %v606
        %v970 = vadd.f32 %v521, %v610
        %v971 = vadd.f32 %v522, %v602
        %v972 = vadd.f32 %v523, %v606
        %v973 = vadd.f32 %v524, %v610
        %v974 = vadd.f32 %v525, %v602
        %v975 = vadd.f32 %v526, %v606
        %v976 = vadd.f32 %v527, %v610
        %v977 = vadd.f32 %v528, %v602
        %v978 = vadd.f32 %v529, %v606
        %v979 = vadd.f32 %v530, %v610
        %v980 = vadd.f32 %v531, %v602
        %v981 = vadd.f32 %v532, %v606
        %v982 = vadd.f32 %v533, %v610
        %v983 = vadd.f32 %v534, %v602
        %v984 = vadd.f32 %v535, %v606
        %v985 = vadd.f32 %v536, %v610
        %v986 = vadd.f32 %v537, %v602
        %v987 = vadd.f32 %v538, %v606
        %v988 = vadd.f32 %v539, %v610
        %v989 = vadd.f32 %v540, %v602
        %v990 = vadd.f32 %v541, %v606
        %v991 = vadd.f32 %v542, %v610
        %v992 = vadd.f32 %v543, %v602
        %v993 = vadd.f32 %v544, %v606
        %v994 = vadd.f32 %v545, %v610
        %v995 = vadd.f32 %v546, %v602
        %v996 = vadd.f32 %v547, %v606
        %v997 = vadd.f32 %v548, %v610
        %v998 = vadd.f32 %v549, %v602
        %v999 = vadd.f32 %v550, %v606
        %v1000 = vadd.f32 %v551, %v610
        %v1001 = vadd.f32 %v552, %v602
        %v1002 = vadd.f32 %v553, %v606
        %v1003 = vadd.f32 %v554, %v610
        %v1004 = vadd.f32 %v555, %v602
        %v1005 = vadd.f32 %v556, %v606
        %v1006 = vadd.f32 %v557, %v610
        %v1007 = vadd.f32 %v558, %v602
        %v1008 = vadd.f32 %v559, %v606
        %v1009 = vadd.f32 %v560, %v610
        %v1010 = vadd.f32 %v561, %v602
        %v1011 = vadd.f32 %v562, %v606
        %v1012 = vadd.f32 %v563, %v610
        %v1013 = vadd.f32 %v564, %v602
        %v1014 = vadd.f32 %v565, %v606
        %v1015 = vadd.f32 %v566, %v610
        %v1016 = vadd.f32 %v567, %v602
        %v1017 = vadd.f32 %v568, %v606
        %v1018 = vadd.f32 %v569, %v610
        %v1019 = vadd.f32 %v570, %v602
        %v1020 = vadd.f32 %v571, %v606
        %v1021 = vadd.f32 %v572, %v610
        %v1022 = vadd.f32 %v573, %v602
        %v1023 = vadd.f32 %v574, %v606
        %v1024 = vadd.f32 %v575, %v610
        %v1025 = vadd.f32 %v576, %v602
        %v1026 = vadd.f32 %v577, %v606
        %v1027 = vadd.f32 %v578, %v610
        %v1028 = vadd.f32 %v579, %v602
        %v1029 = vadd.f32 %v580, %v606
        %v1030 = vadd.f32 %v581, %v610
        %v1031 = vadd.f32 %v582, %v602
        %v1032 = vadd.f32 %v583, %v606
        %v1033 = vadd.f32 %v584, %v610
        %v1034 = vadd.f32 %v585, %v602
        %v1035 = vadd.f32 %v586, %v606
        %v1036 = vadd.f32 %v587, %v610
        %v1037 = vadd.f32 %v588, %v602
        %v1038 = vadd.f32 %v589, %v606
        %v1039 = vadd.f32 %v590, %v610
        %v1040 = vadd.f32 %v591, %v602
        %v1041 = vadd.f32 %v592, %v606
        %v1042 = vadd.f32 %v593, %v610
        %v1043 = vadd.f32 %v594, %v602
        %v1044 = vadd.f32 %v595, %v606
        %v1045 = vadd.f32 %v596, %v610
        %1046 = vst [vmem:[%s162] sm:$0xff] %v614
        %1047 = vst [vmem:[%s162 + $0x8] sm:$0xff] %v615
        %1048 = vst [vmem:[%s162 + $0x10] sm:$0xff] %v616
        %1049 = vst [vmem:[%s162 + $0x18] sm:$0xff] %v617
        %1050 = vst [vmem:[%s162 + $0x20] sm:$0xff] %v618
        %1051 = vst [vmem:[%s162 + $0x28] sm:$0xff] %v619
        %1052 = vst [vmem:[%s162 + $0x30] sm:$0xff] %v620
        %1053 = vst [vmem:[%s162 + $0x38] sm:$0xff] %v621
        %1054 = vst [vmem:[%s162 + $0x40] sm:$0xff] %v622
        %1055 = vst [vmem:[%s162 + $0x48] sm:$0xff] %v623
        %1056 = vst [vmem:[%s162 + $0x50] sm:$0xff] %v624
        %1057 = vst [vmem:[%s162 + $0x58] sm:$0xff] %v625
        %1058 = vst [vmem:[%s162 + $0x60] sm:$0xff] %v626
        %1059 = vst [vmem:[%s162 + $0x68] sm:$0xff] %v627
        %1060 = vst [vmem:[%s162 + $0x70] sm:$0xff] %v628
        %1061 = vst [vmem:[%s162 + $0x78] sm:$0xff] %v629
        %1062 = vst [vmem:[%s162 + $0x80] sm:$0xff] %v630
        %1063 = vst [vmem:[%s162 + $0x88] sm:$0xff] %v631
        %1064 = vst [vmem:[%s162 + $0x90] sm:$0xff] %v632
        %1065 = vst [vmem:[%s162 + $0x98] sm:$0xff] %v633
        %1066 = vst [vmem:[%s162 + $0xa0] sm:$0xff] %v634
        %1067 = vst [vmem:[%s162 + $0xa8] sm:$0xff] %v635
        %1068 = vst [vmem:[%s162 + $0xb0] sm:$0xff] %v636
        %1069 = vst [vmem:[%s162 + $0xb8] sm:$0xff] %v637
        %1070 = vst [vmem:[%s162 + $0xc0] sm:$0xff] %v638
        %1071 = vst [vmem:[%s162 + $0xc8] sm:$0xff] %v639
        %1072 = vst [vmem:[%s162 + $0xd0] sm:$0xff] %v640
        %1073 = vst [vmem:[%s162 + $0xd8] sm:$0xff] %v641
        %1074 = vst [vmem:[%s162 + $0xe0] sm:$0xff] %v642
        %1075 = vst [vmem:[%s162 + $0xe8] sm:$0xff] %v643
        %1076 = vst [vmem:[%s162 + $0xf0] sm:$0xff] %v644
        %1077 = vst [vmem:[%s162 + $0xf8] sm:$0xff] %v645
        %1078 = vst [vmem:[%s162 + $0x100] sm:$0xff] %v646
        %1079 = vst [vmem:[%s162 + $0x108] sm:$0xff] %v647
        %1080 = vst [vmem:[%s162 + $0x110] sm:$0xff] %v648
        %1081 = vst [vmem:[%s162 + $0x118] sm:$0xff] %v649
        %1082 = vst [vmem:[%s162 + $0x120] sm:$0xff] %v650
        %1083 = vst [vmem:[%s162 + $0x128] sm:$0xff] %v651
        %1084 = vst [vmem:[%s162 + $0x130] sm:$0xff] %v652
        %1085 = vst [vmem:[%s162 + $0x138] sm:$0xff] %v653
        %1086 = vst [vmem:[%s162 + $0x140] sm:$0xff] %v654
        %1087 = vst [vmem:[%s162 + $0x148] sm:$0xff] %v655
        %1088 = vst [vmem:[%s162 + $0x150] sm:$0xff] %v656
        %1089 = vst [vmem:[%s162 + $0x158] sm:$0xff] %v657
        %1090 = vst [vmem:[%s162 + $0x160] sm:$0xff] %v658
        %1091 = vst [vmem:[%s162 + $0x168] sm:$0xff] %v659
        %1092 = vst [vmem:[%s162 + $0x170] sm:$0xff] %v660
        %1093 = vst [vmem:[%s162 + $0x178] sm:$0xff] %v661
        %1094 = vst [vmem:[%s162 + $0x180] sm:$0xff] %v662
        %1095 = vst [vmem:[%s162 + $0x188] sm:$0xff] %v663
        %1096 = vst [vmem:[%s162 + $0x190] sm:$0xff] %v664
        %1097 = vst [vmem:[%s162 + $0x198] sm:$0xff] %v665
        %1098 = vst [vmem:[%s162 + $0x1a0] sm:$0xff] %v666
        %1099 = vst [vmem:[%s162 + $0x1a8] sm:$0xff] %v667
        %1100 = vst [vmem:[%s162 + $0x1b0] sm:$0xff] %v668
        %1101 = vst [vmem:[%s162 + $0x1b8] sm:$0xff] %v669
        %1102 = vst [vmem:[%s162 + $0x1c0] sm:$0xff] %v670
        %1103 = vst [vmem:[%s162 + $0x1c8] sm:$0xff] %v671
        %1104 = vst [vmem:[%s162 + $0x1d0] sm:$0xff] %v672
        %1105 = vst [vmem:[%s162 + $0x1d8] sm:$0xff] %v673
        %1106 = vst [vmem:[%s162 + $0x1e0] sm:$0xff] %v674
        %1107 = vst [vmem:[%s162 + $0x1e8] sm:$0xff] %v675
        %1108 = vst [vmem:[%s162 + $0x1f0] sm:$0xff] %v676
        %1109 = vst [vmem:[%s162 + $0x1f8] sm:$0xff] %v677
        %1110 = vst [vmem:[%s162 + $0x200] sm:$0xff] %v678
        %1111 = vst [vmem:[%s162 + $0x208] sm:$0xff] %v679
        %1112 = vst [vmem:[%s162 + $0x210] sm:$0xff] %v680
        %1113 = vst [vmem:[%s162 + $0x218] sm:$0xff] %v681
        %1114 = vst [vmem:[%s162 + $0x220] sm:$0xff] %v682
        %1115 = vst [vmem:[%s162 + $0x228] sm:$0xff] %v683
        %1116 = vst [vmem:[%s162 + $0x230] sm:$0xff] %v684
        %1117 = vst [vmem:[%s162 + $0x238] sm:$0xff] %v685
        %1118 = vst [vmem:[%s162 + $0x240] sm:$0xff] %v686
        %1119 = vst [vmem:[%s162 + $0x248] sm:$0xff] %v687
        %1120 = vst [vmem:[%s162 + $0x250] sm:$0xff] %v688
        %1121 = vst [vmem:[%s162 + $0x258] sm:$0xff] %v689
        %1122 = vst [vmem:[%s162 + $0x260] sm:$0xff] %v690
        %1123 = vst [vmem:[%s162 + $0x268] sm:$0xff] %v691
        %1124 = vst [vmem:[%s162 + $0x270] sm:$0xff] %v692
        %1125 = vst [vmem:[%s162 + $0x278] sm:$0xff] %v693
        %1126 = vst [vmem:[%s162 + $0x280] sm:$0xff] %v694
        %1127 = vst [vmem:[%s162 + $0x288] sm:$0xff] %v695
        %1128 = vst [vmem:[%s162 + $0x290] sm:$0xff] %v696
        %1129 = vst [vmem:[%s162 + $0x298] sm:$0xff] %v697
        %1130 = vst [vmem:[%s162 + $0x2a0] sm:$0xff] %v698
        %1131 = vst [vmem:[%s162 + $0x2a8] sm:$0xff] %v699
        %1132 = vst [vmem:[%s162 + $0x2b0] sm:$0xff] %v700
        %1133 = vst [vmem:[%s162 + $0x2b8] sm:$0xff] %v701
        %1134 = vst [vmem:[%s162 + $0x2c0] sm:$0xff] %v702
        %1135 = vst [vmem:[%s162 + $0x2c8] sm:$0xff] %v703
        %1136 = vst [vmem:[%s162 + $0x2d0] sm:$0xff] %v704
        %1137 = vst [vmem:[%s162 + $0x2d8] sm:$0xff] %v705
        %1138 = vst [vmem:[%s162 + $0x2e0] sm:$0xff] %v706
        %1139 = vst [vmem:[%s162 + $0x2e8] sm:$0xff] %v707
        %1140 = vst [vmem:[%s162 + $0x2f0] sm:$0xff] %v708
        %1141 = vst [vmem:[%s162 + $0x2f8] sm:$0xff] %v709
        %1142 = vst [vmem:[%s162 + $0x300] sm:$0xff] %v710
        %1143 = vst [vmem:[%s162 + $0x308] sm:$0xff] %v711
        %1144 = vst [vmem:[%s162 + $0x310] sm:$0xff] %v712
        %1145 = vst [vmem:[%s162 + $0x318] sm:$0xff] %v713
        %1146 = vst [vmem:[%s162 + $0x320] sm:$0xff] %v714
        %1147 = vst [vmem:[%s162 + $0x328] sm:$0xff] %v715
        %1148 = vst [vmem:[%s162 + $0x330] sm:$0xff] %v716
        %1149 = vst [vmem:[%s162 + $0x338] sm:$0xff] %v717
        %1150 = vst [vmem:[%s162 + $0x340] sm:$0xff] %v718
        %1151 = vst [vmem:[%s162 + $0x348] sm:$0xff] %v719
        %1152 = vst [vmem:[%s162 + $0x350] sm:$0xff] %v720
        %1153 = vst [vmem:[%s162 + $0x358] sm:$0xff] %v721
        %1154 = vst [vmem:[%s162 + $0x360] sm:$0xff] %v722
        %1155 = vst [vmem:[%s162 + $0x368] sm:$0xff] %v723
        %1156 = vst [vmem:[%s162 + $0x370] sm:$0xff] %v724
        %1157 = vst [vmem:[%s162 + $0x378] sm:$0xff] %v725
        %1158 = vst [vmem:[%s162 + $0x380] sm:$0xff] %v726
        %1159 = vst [vmem:[%s162 + $0x388] sm:$0xff] %v727
        %1160 = vst [vmem:[%s162 + $0x390] sm:$0xff] %v728
        %1161 = vst [vmem:[%s162 + $0x398] sm:$0xff] %v729
        %1162 = vst [vmem:[%s162 + $0x3a0] sm:$0xff] %v730
        %1163 = vst [vmem:[%s162 + $0x3a8] sm:$0xff] %v731
        %1164 = vst [vmem:[%s162 + $0x3b0] sm:$0xff] %v732
        %1165 = vst [vmem:[%s162 + $0x3b8] sm:$0xff] %v733
        %1166 = vst [vmem:[%s162 + $0x3c0] sm:$0xff] %v734
        %1167 = vst [vmem:[%s162 + $0x3c8] sm:$0xff] %v735
        %1168 = vst [vmem:[%s162 + $0x3d0] sm:$0xff] %v736
        %1169 = vst [vmem:[%s162 + $0x3d8] sm:$0xff] %v737
        %1170 = vst [vmem:[%s162 + $0x3e0] sm:$0xff] %v738
        %1171 = vst [vmem:[%s162 + $0x3e8] sm:$0xff] %v739
        %1172 = vst [vmem:[%s162 + $0x3f0] sm:$0xff] %v740
        %1173 = vst [vmem:[%s162 + $0x3f8] sm:$0xff] %v741
        %1174 = vst [vmem:[%s162 + $0x400] sm:$0xff] %v742
        %1175 = vst [vmem:[%s162 + $0x408] sm:$0xff] %v743
        %1176 = vst [vmem:[%s162 + $0x410] sm:$0xff] %v744
        %1177 = vst [vmem:[%s162 + $0x418] sm:$0xff] %v745
        %1178 = vst [vmem:[%s162 + $0x420] sm:$0xff] %v746
        %1179 = vst [vmem:[%s162 + $0x428] sm:$0xff] %v747
        %1180 = vst [vmem:[%s162 + $0x430] sm:$0xff] %v748
        %1181 = vst [vmem:[%s162 + $0x438] sm:$0xff] %v749
        %1182 = vst [vmem:[%s162 + $0x440] sm:$0xff] %v750
        %1183 = vst [vmem:[%s162 + $0x448] sm:$0xff] %v751
        %1184 = vst [vmem:[%s162 + $0x450] sm:$0xff] %v752
        %1185 = vst [vmem:[%s162 + $0x458] sm:$0xff] %v753
        %1186 = vst [vmem:[%s162 + $0x460] sm:$0xff] %v754
        %1187 = vst [vmem:[%s162 + $0x468] sm:$0xff] %v755
        %1188 = vst [vmem:[%s162 + $0x470] sm:$0xff] %v756
        %1189 = vst [vmem:[%s162 + $0x478] sm:$0xff] %v757
        %1190 = vst [vmem:[%s162 + $0x480] sm:$0xff] %v758
        %1191 = vst [vmem:[%s162 + $0x488] sm:$0xff] %v759
        %1192 = vst [vmem:[%s162 + $0x490] sm:$0xff] %v760
        %1193 = vst [vmem:[%s162 + $0x498] sm:$0xff] %v761
        %1194 = vst [vmem:[%s162 + $0x4a0] sm:$0xff] %v762
        %1195 = vst [vmem:[%s162 + $0x4a8] sm:$0xff] %v763
        %1196 = vst [vmem:[%s162 + $0x4b0] sm:$0xff] %v764
        %1197 = vst [vmem:[%s162 + $0x4b8] sm:$0xff] %v765
        %1198 = vst [vmem:[%s162 + $0x4c0] sm:$0xff] %v766
        %1199 = vst [vmem:[%s162 + $0x4c8] sm:$0xff] %v767
        %1200 = vst [vmem:[%s162 + $0x4d0] sm:$0xff] %v768
        %1201 = vst [vmem:[%s162 + $0x4d8] sm:$0xff] %v769
        %1202 = vst [vmem:[%s162 + $0x4e0] sm:$0xff] %v770
        %1203 = vst [vmem:[%s162 + $0x4e8] sm:$0xff] %v771
        %1204 = vst [vmem:[%s162 + $0x4f0] sm:$0xff] %v772
        %1205 = vst [vmem:[%s162 + $0x4f8] sm:$0xff] %v773
        %1206 = vst [vmem:[%s162 + $0x500] sm:$0xff] %v774
        %1207 = vst [vmem:[%s162 + $0x508] sm:$0xff] %v775
        %1208 = vst [vmem:[%s162 + $0x510] sm:$0xff] %v776
        %1209 = vst [vmem:[%s162 + $0x518] sm:$0xff] %v777
        %1210 = vst [vmem:[%s162 + $0x520] sm:$0xff] %v778
        %1211 = vst [vmem:[%s162 + $0x528] sm:$0xff] %v779
        %1212 = vst [vmem:[%s162 + $0x530] sm:$0xff] %v780
        %1213 = vst [vmem:[%s162 + $0x538] sm:$0xff] %v781
        %1214 = vst [vmem:[%s162 + $0x540] sm:$0xff] %v782
        %1215 = vst [vmem:[%s162 + $0x548] sm:$0xff] %v783
        %1216 = vst [vmem:[%s162 + $0x550] sm:$0xff] %v784
        %1217 = vst [vmem:[%s162 + $0x558] sm:$0xff] %v785
        %1218 = vst [vmem:[%s162 + $0x560] sm:$0xff] %v786
        %1219 = vst [vmem:[%s162 + $0x568] sm:$0xff] %v787
        %1220 = vst [vmem:[%s162 + $0x570] sm:$0xff] %v788
        %1221 = vst [vmem:[%s162 + $0x578] sm:$0xff] %v789
        %1222 = vst [vmem:[%s162 + $0x580] sm:$0xff] %v790
        %1223 = vst [vmem:[%s162 + $0x588] sm:$0xff] %v791
        %1224 = vst [vmem:[%s162 + $0x590] sm:$0xff] %v792
        %1225 = vst [vmem:[%s162 + $0x598] sm:$0xff] %v793
        %1226 = vst [vmem:[%s162 + $0x5a0] sm:$0xff] %v794
        %1227 = vst [vmem:[%s162 + $0x5a8] sm:$0xff] %v795
        %1228 = vst [vmem:[%s162 + $0x5b0] sm:$0xff] %v796
        %1229 = vst [vmem:[%s162 + $0x5b8] sm:$0xff] %v797
        %1230 = vst [vmem:[%s162 + $0x5c0] sm:$0xff] %v798
        %1231 = vst [vmem:[%s162 + $0x5c8] sm:$0xff] %v799
        %1232 = vst [vmem:[%s162 + $0x5d0] sm:$0xff] %v800
        %1233 = vst [vmem:[%s162 + $0x5d8] sm:$0xff] %v801
        %1234 = vst [vmem:[%s162 + $0x5e0] sm:$0xff] %v802
        %1235 = vst [vmem:[%s162 + $0x5e8] sm:$0xff] %v803
        %1236 = vst [vmem:[%s162 + $0x5f0] sm:$0xff] %v804
        %1237 = vst [vmem:[%s162 + $0x5f8] sm:$0xff] %v805
        %1238 = vst [vmem:[%s162 + $0x600] sm:$0xff] %v806
        %1239 = vst [vmem:[%s162 + $0x608] sm:$0xff] %v807
        %1240 = vst [vmem:[%s162 + $0x610] sm:$0xff] %v808
        %1241 = vst [vmem:[%s162 + $0x618] sm:$0xff] %v809
        %1242 = vst [vmem:[%s162 + $0x620] sm:$0xff] %v810
        %1243 = vst [vmem:[%s162 + $0x628] sm:$0xff] %v811
        %1244 = vst [vmem:[%s162 + $0x630] sm:$0xff] %v812
        %1245 = vst [vmem:[%s162 + $0x638] sm:$0xff] %v813
        %1246 = vst [vmem:[%s162 + $0x640] sm:$0xff] %v814
        %1247 = vst [vmem:[%s162 + $0x648] sm:$0xff] %v815
        %1248 = vst [vmem:[%s162 + $0x650] sm:$0xff] %v816
        %1249 = vst [vmem:[%s162 + $0x658] sm:$0xff] %v817
        %1250 = vst [vmem:[%s162 + $0x660] sm:$0xff] %v818
        %1251 = vst [vmem:[%s162 + $0x668] sm:$0xff] %v819
        %1252 = vst [vmem:[%s162 + $0x670] sm:$0xff] %v820
        %1253 = vst [vmem:[%s162 + $0x678] sm:$0xff] %v821
        %1254 = vst [vmem:[%s162 + $0x680] sm:$0xff] %v822
        %1255 = vst [vmem:[%s162 + $0x688] sm:$0xff] %v823
        %1256 = vst [vmem:[%s162 + $0x690] sm:$0xff] %v824
        %1257 = vst [vmem:[%s162 + $0x698] sm:$0xff] %v825
        %1258 = vst [vmem:[%s162 + $0x6a0] sm:$0xff] %v826
        %1259 = vst [vmem:[%s162 + $0x6a8] sm:$0xff] %v827
        %1260 = vst [vmem:[%s162 + $0x6b0] sm:$0xff] %v828
        %1261 = vst [vmem:[%s162 + $0x6b8] sm:$0xff] %v829
        %1262 = vst [vmem:[%s162 + $0x6c0] sm:$0xff] %v830
        %1263 = vst [vmem:[%s162 + $0x6c8] sm:$0xff] %v831
        %1264 = vst [vmem:[%s162 + $0x6d0] sm:$0xff] %v832
        %1265 = vst [vmem:[%s162 + $0x6d8] sm:$0xff] %v833
        %1266 = vst [vmem:[%s162 + $0x6e0] sm:$0xff] %v834
        %1267 = vst [vmem:[%s162 + $0x6e8] sm:$0xff] %v835
        %1268 = vst [vmem:[%s162 + $0x6f0] sm:$0xff] %v836
        %1269 = vst [vmem:[%s162 + $0x6f8] sm:$0xff] %v837
        %1270 = vst [vmem:[%s162 + $0x700] sm:$0xff] %v838
        %1271 = vst [vmem:[%s162 + $0x708] sm:$0xff] %v839
        %1272 = vst [vmem:[%s162 + $0x710] sm:$0xff] %v840
        %1273 = vst [vmem:[%s162 + $0x718] sm:$0xff] %v841
        %1274 = vst [vmem:[%s162 + $0x720] sm:$0xff] %v842
        %1275 = vst [vmem:[%s162 + $0x728] sm:$0xff] %v843
        %1276 = vst [vmem:[%s162 + $0x730] sm:$0xff] %v844
        %1277 = vst [vmem:[%s162 + $0x738] sm:$0xff] %v845
        %1278 = vst [vmem:[%s162 + $0x740] sm:$0xff] %v846
        %1279 = vst [vmem:[%s162 + $0x748] sm:$0xff] %v847
        %1280 = vst [vmem:[%s162 + $0x750] sm:$0xff] %v848
        %1281 = vst [vmem:[%s162 + $0x758] sm:$0xff] %v849
        %1282 = vst [vmem:[%s162 + $0x760] sm:$0xff] %v850
        %1283 = vst [vmem:[%s162 + $0x768] sm:$0xff] %v851
        %1284 = vst [vmem:[%s162 + $0x770] sm:$0xff] %v852
        %1285 = vst [vmem:[%s162 + $0x778] sm:$0xff] %v853
        %1286 = vst [vmem:[%s162 + $0x780] sm:$0xff] %v854
        %1287 = vst [vmem:[%s162 + $0x788] sm:$0xff] %v855
        %1288 = vst [vmem:[%s162 + $0x790] sm:$0xff] %v856
        %1289 = vst [vmem:[%s162 + $0x798] sm:$0xff] %v857
        %1290 = vst [vmem:[%s162 + $0x7a0] sm:$0xff] %v858
        %1291 = vst [vmem:[%s162 + $0x7a8] sm:$0xff] %v859
        %1292 = vst [vmem:[%s162 + $0x7b0] sm:$0xff] %v860
        %1293 = vst [vmem:[%s162 + $0x7b8] sm:$0xff] %v861
        %1294 = vst [vmem:[%s162 + $0x7c0] sm:$0xff] %v862
        %1295 = vst [vmem:[%s162 + $0x7c8] sm:$0xff] %v863
        %1296 = vst [vmem:[%s162 + $0x7d0] sm:$0xff] %v864
        %1297 = vst [vmem:[%s162 + $0x7d8] sm:$0xff] %v865
        %1298 = vst [vmem:[%s162 + $0x7e0] sm:$0xff] %v866
        %1299 = vst [vmem:[%s162 + $0x7e8] sm:$0xff] %v867
        %1300 = vst [vmem:[%s162 + $0x7f0] sm:$0xff] %v868
        %1301 = vst [vmem:[%s162 + $0x7f8] sm:$0xff] %v869
        %1302 = vst [vmem:[%s162 + $0x800] sm:$0xff] %v870
        %1303 = vst [vmem:[%s162 + $0x808] sm:$0xff] %v871
        %1304 = vst [vmem:[%s162 + $0x810] sm:$0xff] %v872
        %1305 = vst [vmem:[%s162 + $0x818] sm:$0xff] %v873
        %1306 = vst [vmem:[%s162 + $0x820] sm:$0xff] %v874
        %1307 = vst [vmem:[%s162 + $0x828] sm:$0xff] %v875
        %1308 = vst [vmem:[%s162 + $0x830] sm:$0xff] %v876
        %1309 = vst [vmem:[%s162 + $0x838] sm:$0xff] %v877
        %1310 = vst [vmem:[%s162 + $0x840] sm:$0xff] %v878
        %1311 = vst [vmem:[%s162 + $0x848] sm:$0xff] %v879
        %1312 = vst [vmem:[%s162 + $0x850] sm:$0xff] %v880
        %1313 = vst [vmem:[%s162 + $0x858] sm:$0xff] %v881
        %1314 = vst [vmem:[%s162 + $0x860] sm:$0xff] %v882
        %1315 = vst [vmem:[%s162 + $0x868] sm:$0xff] %v883
        %1316 = vst [vmem:[%s162 + $0x870] sm:$0xff] %v884
        %1317 = vst [vmem:[%s162 + $0x878] sm:$0xff] %v885
        %1318 = vst [vmem:[%s162 + $0x880] sm:$0xff] %v886
        %1319 = vst [vmem:[%s162 + $0x888] sm:$0xff] %v887
        %1320 = vst [vmem:[%s162 + $0x890] sm:$0xff] %v888
        %1321 = vst [vmem:[%s162 + $0x898] sm:$0xff] %v889
        %1322 = vst [vmem:[%s162 + $0x8a0] sm:$0xff] %v890
        %1323 = vst [vmem:[%s162 + $0x8a8] sm:$0xff] %v891
        %1324 = vst [vmem:[%s162 + $0x8b0] sm:$0xff] %v892
        %1325 = vst [vmem:[%s162 + $0x8b8] sm:$0xff] %v893
        %1326 = vst [vmem:[%s162 + $0x8c0] sm:$0xff] %v894
        %1327 = vst [vmem:[%s162 + $0x8c8] sm:$0xff] %v895
        %1328 = vst [vmem:[%s162 + $0x8d0] sm:$0xff] %v896
        %1329 = vst [vmem:[%s162 + $0x8d8] sm:$0xff] %v897
        %1330 = vst [vmem:[%s162 + $0x8e0] sm:$0xff] %v898
        %1331 = vst [vmem:[%s162 + $0x8e8] sm:$0xff] %v899
        %1332 = vst [vmem:[%s162 + $0x8f0] sm:$0xff] %v900
        %1333 = vst [vmem:[%s162 + $0x8f8] sm:$0xff] %v901
        %1334 = vst [vmem:[%s162 + $0x900] sm:$0xff] %v902
        %1335 = vst [vmem:[%s162 + $0x908] sm:$0xff] %v903
        %1336 = vst [vmem:[%s162 + $0x910] sm:$0xff] %v904
        %1337 = vst [vmem:[%s162 + $0x918] sm:$0xff] %v905
        %1338 = vst [vmem:[%s162 + $0x920] sm:$0xff] %v906
        %1339 = vst [vmem:[%s162 + $0x928] sm:$0xff] %v907
        %1340 = vst [vmem:[%s162 + $0x930] sm:$0xff] %v908
        %1341 = vst [vmem:[%s162 + $0x938] sm:$0xff] %v909
        %1342 = vst [vmem:[%s162 + $0x940] sm:$0xff] %v910
        %1343 = vst [vmem:[%s162 + $0x948] sm:$0xff] %v911
        %1344 = vst [vmem:[%s162 + $0x950] sm:$0xff] %v912
        %1345 = vst [vmem:[%s162 + $0x958] sm:$0xff] %v913
        %1346 = vst [vmem:[%s162 + $0x960] sm:$0xff] %v914
        %1347 = vst [vmem:[%s162 + $0x968] sm:$0xff] %v915
        %1348 = vst [vmem:[%s162 + $0x970] sm:$0xff] %v916
        %1349 = vst [vmem:[%s162 + $0x978] sm:$0xff] %v917
        %1350 = vst [vmem:[%s162 + $0x980] sm:$0xff] %v918
        %1351 = vst [vmem:[%s162 + $0x988] sm:$0xff] %v919
        %1352 = vst [vmem:[%s162 + $0x990] sm:$0xff] %v920
        %1353 = vst [vmem:[%s162 + $0x998] sm:$0xff] %v921
        %1354 = vst [vmem:[%s162 + $0x9a0] sm:$0xff] %v922
        %1355 = vst [vmem:[%s162 + $0x9a8] sm:$0xff] %v923
        %1356 = vst [vmem:[%s162 + $0x9b0] sm:$0xff] %v924
        %1357 = vst [vmem:[%s162 + $0x9b8] sm:$0xff] %v925
        %1358 = vst [vmem:[%s162 + $0x9c0] sm:$0xff] %v926
        %1359 = vst [vmem:[%s162 + $0x9c8] sm:$0xff] %v927
        %1360 = vst [vmem:[%s162 + $0x9d0] sm:$0xff] %v928
        %1361 = vst [vmem:[%s162 + $0x9d8] sm:$0xff] %v929
        %1362 = vst [vmem:[%s162 + $0x9e0] sm:$0xff] %v930
        %1363 = vst [vmem:[%s162 + $0x9e8] sm:$0xff] %v931
        %1364 = vst [vmem:[%s162 + $0x9f0] sm:$0xff] %v932
        %1365 = vst [vmem:[%s162 + $0x9f8] sm:$0xff] %v933
        %1366 = vst [vmem:[%s162 + $0xa00] sm:$0xff] %v934
        %1367 = vst [vmem:[%s162 + $0xa08] sm:$0xff] %v935
        %1368 = vst [vmem:[%s162 + $0xa10] sm:$0xff] %v936
        %1369 = vst [vmem:[%s162 + $0xa18] sm:$0xff] %v937
        %1370 = vst [vmem:[%s162 + $0xa20] sm:$0xff] %v938
        %1371 = vst [vmem:[%s162 + $0xa28] sm:$0xff] %v939
        %1372 = vst [vmem:[%s162 + $0xa30] sm:$0xff] %v940
        %1373 = vst [vmem:[%s162 + $0xa38] sm:$0xff] %v941
        %1374 = vst [vmem:[%s162 + $0xa40] sm:$0xff] %v942
        %1375 = vst [vmem:[%s162 + $0xa48] sm:$0xff] %v943
        %1376 = vst [vmem:[%s162 + $0xa50] sm:$0xff] %v944
        %1377 = vst [vmem:[%s162 + $0xa58] sm:$0xff] %v945
        %1378 = vst [vmem:[%s162 + $0xa60] sm:$0xff] %v946
        %1379 = vst [vmem:[%s162 + $0xa68] sm:$0xff] %v947
        %1380 = vst [vmem:[%s162 + $0xa70] sm:$0xff] %v948
        %1381 = vst [vmem:[%s162 + $0xa78] sm:$0xff] %v949
        %1382 = vst [vmem:[%s162 + $0xa80] sm:$0xff] %v950
        %1383 = vst [vmem:[%s162 + $0xa88] sm:$0xff] %v951
        %1384 = vst [vmem:[%s162 + $0xa90] sm:$0xff] %v952
        %1385 = vst [vmem:[%s162 + $0xa98] sm:$0xff] %v953
        %1386 = vst [vmem:[%s162 + $0xaa0] sm:$0xff] %v954
        %1387 = vst [vmem:[%s162 + $0xaa8] sm:$0xff] %v955
        %1388 = vst [vmem:[%s162 + $0xab0] sm:$0xff] %v956
        %1389 = vst [vmem:[%s162 + $0xab8] sm:$0xff] %v957
        %1390 = vst [vmem:[%s162 + $0xac0] sm:$0xff] %v958
        %1391 = vst [vmem:[%s162 + $0xac8] sm:$0xff] %v959
        %1392 = vst [vmem:[%s162 + $0xad0] sm:$0xff] %v960
        %1393 = vst [vmem:[%s162 + $0xad8] sm:$0xff] %v961
        %1394 = vst [vmem:[%s162 + $0xae0] sm:$0xff] %v962
        %1395 = vst [vmem:[%s162 + $0xae8] sm:$0xff] %v963
        %1396 = vst [vmem:[%s162 + $0xaf0] sm:$0xff] %v964
        %1397 = vst [vmem:[%s162 + $0xaf8] sm:$0xff] %v965
        %1398 = vst [vmem:[%s162 + $0xb00] sm:$0xff] %v966
        %1399 = vst [vmem:[%s162 + $0xb08] sm:$0xff] %v967
        %1400 = vst [vmem:[%s162 + $0xb10] sm:$0xff] %v968
        %1401 = vst [vmem:[%s162 + $0xb18] sm:$0xff] %v969
        %1402 = vst [vmem:[%s162 + $0xb20] sm:$0xff] %v970
        %1403 = vst [vmem:[%s162 + $0xb28] sm:$0xff] %v971
        %1404 = vst [vmem:[%s162 + $0xb30] sm:$0xff] %v972
        %1405 = vst [vmem:[%s162 + $0xb38] sm:$0xff] %v973
        %1406 = vst [vmem:[%s162 + $0xb40] sm:$0xff] %v974
        %1407 = vst [vmem:[%s162 + $0xb48] sm:$0xff] %v975
        %1408 = vst [vmem:[%s162 + $0xb50] sm:$0xff] %v976
        %1409 = vst [vmem:[%s162 + $0xb58] sm:$0xff] %v977
        %1410 = vst [vmem:[%s162 + $0xb60] sm:$0xff] %v978
        %1411 = vst [vmem:[%s162 + $0xb68] sm:$0xff] %v979
        %1412 = vst [vmem:[%s162 + $0xb70] sm:$0xff] %v980
        %1413 = vst [vmem:[%s162 + $0xb78] sm:$0xff] %v981
        %1414 = vst [vmem:[%s162 + $0xb80] sm:$0xff] %v982
        %1415 = vst [vmem:[%s162 + $0xb88] sm:$0xff] %v983
        %1416 = vst [vmem:[%s162 + $0xb90] sm:$0xff] %v984
        %1417 = vst [vmem:[%s162 + $0xb98] sm:$0xff] %v985
        %1418 = vst [vmem:[%s162 + $0xba0] sm:$0xff] %v986
        %1419 = vst [vmem:[%s162 + $0xba8] sm:$0xff] %v987
        %1420 = vst [vmem:[%s162 + $0xbb0] sm:$0xff] %v988
        %1421 = vst [vmem:[%s162 + $0xbb8] sm:$0xff] %v989
        %1422 = vst [vmem:[%s162 + $0xbc0] sm:$0xff] %v990
        %1423 = vst [vmem:[%s162 + $0xbc8] sm:$0xff] %v991
        %1424 = vst [vmem:[%s162 + $0xbd0] sm:$0xff] %v992
        %1425 = vst [vmem:[%s162 + $0xbd8] sm:$0xff] %v993
        %1426 = vst [vmem:[%s162 + $0xbe0] sm:$0xff] %v994
        %1427 = vst [vmem:[%s162 + $0xbe8] sm:$0xff] %v995
        %1428 = vst [vmem:[%s162 + $0xbf0] sm:$0xff] %v996
        %1429 = vst [vmem:[%s162 + $0xbf8] sm:$0xff] %v997
        %1430 = vst [vmem:[%s162 + $0xc00] sm:$0xff] %v998
        %1431 = vst [vmem:[%s162 + $0xc08] sm:$0xff] %v999
        %1432 = vst [vmem:[%s162 + $0xc10] sm:$0xff] %v1000
        %1433 = vst [vmem:[%s162 + $0xc18] sm:$0xff] %v1001
        %1434 = vst [vmem:[%s162 + $0xc20] sm:$0xff] %v1002
        %1435 = vst [vmem:[%s162 + $0xc28] sm:$0xff] %v1003
        %1436 = vst [vmem:[%s162 + $0xc30] sm:$0xff] %v1004
        %1437 = vst [vmem:[%s162 + $0xc38] sm:$0xff] %v1005
        %1438 = vst [vmem:[%s162 + $0xc40] sm:$0xff] %v1006
        %1439 = vst [vmem:[%s162 + $0xc48] sm:$0xff] %v1007
        %1440 = vst [vmem:[%s162 + $0xc50] sm:$0xff] %v1008
        %1441 = vst [vmem:[%s162 + $0xc58] sm:$0xff] %v1009
        %1442 = vst [vmem:[%s162 + $0xc60] sm:$0xff] %v1010
        %1443 = vst [vmem:[%s162 + $0xc68] sm:$0xff] %v1011
        %1444 = vst [vmem:[%s162 + $0xc70] sm:$0xff] %v1012
        %1445 = vst [vmem:[%s162 + $0xc78] sm:$0xff] %v1013
        %1446 = vst [vmem:[%s162 + $0xc80] sm:$0xff] %v1014
        %1447 = vst [vmem:[%s162 + $0xc88] sm:$0xff] %v1015
        %1448 = vst [vmem:[%s162 + $0xc90] sm:$0xff] %v1016
        %1449 = vst [vmem:[%s162 + $0xc98] sm:$0xff] %v1017
        %1450 = vst [vmem:[%s162 + $0xca0] sm:$0xff] %v1018
        %1451 = vst [vmem:[%s162 + $0xca8] sm:$0xff] %v1019
        %1452 = vst [vmem:[%s162 + $0xcb0] sm:$0xff] %v1020
        %1453 = vst [vmem:[%s162 + $0xcb8] sm:$0xff] %v1021
        %1454 = vst [vmem:[%s162 + $0xcc0] sm:$0xff] %v1022
        %1455 = vst [vmem:[%s162 + $0xcc8] sm:$0xff] %v1023
        %1456 = vst [vmem:[%s162 + $0xcd0] sm:$0xff] %v1024
        %1457 = vst [vmem:[%s162 + $0xcd8] sm:$0xff] %v1025
        %1458 = vst [vmem:[%s162 + $0xce0] sm:$0xff] %v1026
        %1459 = vst [vmem:[%s162 + $0xce8] sm:$0xff] %v1027
        %1460 = vst [vmem:[%s162 + $0xcf0] sm:$0xff] %v1028
        %1461 = vst [vmem:[%s162 + $0xcf8] sm:$0xff] %v1029
        %1462 = vst [vmem:[%s162 + $0xd00] sm:$0xff] %v1030
        %1463 = vst [vmem:[%s162 + $0xd08] sm:$0xff] %v1031
        %1464 = vst [vmem:[%s162 + $0xd10] sm:$0xff] %v1032
        %1465 = vst [vmem:[%s162 + $0xd18] sm:$0xff] %v1033
        %1466 = vst [vmem:[%s162 + $0xd20] sm:$0xff] %v1034
        %1467 = vst [vmem:[%s162 + $0xd28] sm:$0xff] %v1035
        %1468 = vst [vmem:[%s162 + $0xd30] sm:$0xff] %v1036
        %1469 = vst [vmem:[%s162 + $0xd38] sm:$0xff] %v1037
        %1470 = vst [vmem:[%s162 + $0xd40] sm:$0xff] %v1038
        %1471 = vst [vmem:[%s162 + $0xd48] sm:$0xff] %v1039
        %1472 = vst [vmem:[%s162 + $0xd50] sm:$0xff] %v1040
        %1473 = vst [vmem:[%s162 + $0xd58] sm:$0xff] %v1041
        %1474 = vst [vmem:[%s162 + $0xd60] sm:$0xff] %v1042
        %1475 = vst [vmem:[%s162 + $0xd68] sm:$0xff] %v1043
        %1476 = vst [vmem:[%s162 + $0xd70] sm:$0xff] %v1044
        %1477 = vst [vmem:[%s162 + $0xd78] sm:$0xff] %v1045
        %s1478 = sand.u32 %s74, 1
        %s1479 = scalar_lea.sflag [#allocation4], %s1478
        %s1480 = sand.u32 %s74, 1
        %s1481 = smul.addr %s1480, 3456
        %s1482 = scalar_lea.vmem [#allocation5], %s1481
        // Predicated region
        $region33: #{tpu_custom_call.1} parent=27 // pred_check
          %p1483 = pneg %p84
        $region34: #{tpu_custom_call.1} parent=27 // pred_check_branch
          %1485 = sbr.rel (%p1483) target = $region36
        $region35: #{tpu_custom_call.1} parent=27 // pred_region
          %s1486 = smul.u32 144, %s19
          %s1488 = ssub.s32 55296, 55296
          %1489 = vsyncadd %s1479, %s1488
          %s1490 = smul.addr %s1486, 3
          %s1491 = smul.addr %s1490, 128
          %s1492 = scalar_lea.hbm %s2, %s1491
          %s1493 = sshll.u32 %s1482, 4
          %s1494 = int_to_ptr.vmem [resolvable:$true] %s1493
          %1499 = dma.vmem_to_hbm [thread:$0]  %s1494, 55296, %s1492, %s1479, 384, 384, 24
        $region36: #{tpu_custom_call.1} parent=27 // pred_fallthru
          _
      $region28: #{tpu_custom_call.1} parent=5 // pred_fallthru
        _
      %p1500 = scmp.le.s32.totalorder 2, %s14
      // Predicated region
      $region37: #{tpu_custom_call.1} parent=5 // pred_check
        %p1501 = pneg %p1500
      $region38: #{tpu_custom_call.1} parent=5 // pred_check_branch
        %1503 = sbr.rel (%p1501) target = $region40
      $region39: #{tpu_custom_call.1} parent=5 // pred_region
        %s1504 = ssub.s32 %s14, 2
        // Predicated region
        $region41: #{tpu_custom_call.1} parent=39 // pred_check
          %p1505 = pneg %p90
        $region42: #{tpu_custom_call.1} parent=39 // pred_check_branch
          %1507 = sbr.rel (%p1505) target = $region44
        $region43: #{tpu_custom_call.1} parent=39 // pred_region
          %s1508 = sand.u32 %s75, 1
          %s1509 = scalar_lea.sflag [#allocation4], %s1508
          %s1510 = sand.u32 %s75, 1
          %s1511 = smul.addr %s1510, 3456
          %s1512 = scalar_lea.vmem [#allocation5], %s1511
          %1513 = dma.done %s1509, 55296
        $region44: #{tpu_custom_call.1} parent=39 // pred_fallthru
          _
      $region40: #{tpu_custom_call.1} parent=5 // pred_fallthru
        _
    $region6: #{tpu_custom_call.1} parent=1 // loop_footer
      %s18 = sadd.s32 1, %s14
    $region7: #{tpu_custom_call.1} parent=1 // loop_footer_branch
      %13 = sbr.rel target = $region3
    $region8: #{tpu_custom_call.1} parent=1 // loop_exit
      _
    %1514 = vsyncpa [#allocation3], 1
    %s1515 = scalar_lea.sflag [#allocation3], 1
    %1516 = vsyncpa %s1515, 1
    %1517 = vsyncpa [#allocation4], 1
    %s1518 = scalar_lea.sflag [#allocation4], 1
    %1519 = vsyncpa %s1518, 1

</llo_original>
